<compile_context>
chip_gen: v6e
topology: v6e:2x2x1
jax: 0.10.0
libtpu: 0.0.40
codegen_flags: <defaults>
</compile_context>

<pallas_src>
import math

import jax
import jax.numpy as jnp
from jax.experimental import pallas as pl
from jax.experimental.pallas import tpu as pltpu

H1 = 1024          # hidden size of mlp_1 (fixed by the PyTorch module)
H2 = 512           # hidden size of mlp_2 (fixed by the PyTorch module)
LANE = 128


def _round_up(n, m):
    return (n + m - 1) // m * m


# ------------------------------ Pallas kernel ------------------------------

def _mlp_kernel(x_ref, w1_ref, s1_ref, t1_ref, w2_ref, s2_ref, t2_ref,
                w3_ref, b3_ref, o_ref):
    """Fused 3-layer MLP: relu(BN(x@W1)) -> relu(BN(.@W2)) -> .@W3 + b3."""
    # bf16 operands, f32 accumulation on the MXU; f32 epilogues.
    x = x_ref[...].astype(w1_ref.dtype)
    h = jnp.dot(x, w1_ref[...], preferred_element_type=jnp.float32)
    h = jnp.maximum(h * s1_ref[...] + t1_ref[...], 0.0)       # folded BN1 + ReLU
    h = jnp.dot(h.astype(w2_ref.dtype), w2_ref[...],
                preferred_element_type=jnp.float32)
    h = jnp.maximum(h * s2_ref[...] + t2_ref[...], 0.0)       # folded BN2 + ReLU
    y = jnp.dot(h.astype(w3_ref.dtype), w3_ref[...],
                preferred_element_type=jnp.float32) + b3_ref[...]
    o_ref[...] = y.astype(o_ref.dtype)


def mlp_classification_forward(params, x):
    """MLP_Classification_Layer forward (eval mode).  x: (B, inp) -> (B, out)."""
    B, inp = x.shape
    out_size = params['b3'].shape[0]
    n_pad = _round_up(max(out_size, LANE), LANE)               # lane-dense output slab

    def fold(gamma, beta, mean, var, bias, eps=1e-5):
        s = gamma * jax.lax.rsqrt(var + eps)                   # BN scale
        return s, bias * s + (beta - mean * s)                 # fold Linear bias into shift

    s1, t1 = fold(params['bn1_gamma'], params['bn1_beta'],
                  params['bn1_mean'], params['bn1_var'], params['b1'])
    s2, t2 = fold(params['bn2_gamma'], params['bn2_beta'],
                  params['bn2_mean'], params['bn2_var'], params['b2'])

    # Zero-pad the last projection to a 128-lane-dense output (unmasked store).
    w3p = jnp.pad(params['w3'], ((0, 0), (0, n_pad - out_size)))
    b3p = jnp.pad(params['b3'], (0, n_pad - out_size))

    # bf16 weight streams; activations / BN epilogues stay f32.
    w1 = params['w1'].astype(jnp.bfloat16)
    w2 = params['w2'].astype(jnp.bfloat16)
    w3 = w3p.astype(jnp.bfloat16)

    out_padded = pl.pallas_call(
        _mlp_kernel,
        out_shape=jax.ShapeDtypeStruct((B, n_pad), jnp.float32),
        grid=(1,),
        in_specs=[
            pl.BlockSpec((B, inp), lambda i: (0, 0)),
            pl.BlockSpec((inp, H1), lambda i: (0, 0)),
            pl.BlockSpec((1, H1), lambda i: (0, 0)),
            pl.BlockSpec((1, H1), lambda i: (0, 0)),
            pl.BlockSpec((H1, H2), lambda i: (0, 0)),
            pl.BlockSpec((1, H2), lambda i: (0, 0)),
            pl.BlockSpec((1, H2), lambda i: (0, 0)),
            pl.BlockSpec((H2, n_pad), lambda i: (0, 0)),
            pl.BlockSpec((1, n_pad), lambda i: (0, 0)),
        ],
        out_specs=pl.BlockSpec((B, n_pad), lambda i: (0, 0)),
        compiler_params=pltpu.CompilerParams(
            dimension_semantics=("arbitrary",),
            vmem_limit_bytes=32 * 1024 * 1024,
        ),
    )(x, w1, s1.reshape(1, H1), t1.reshape(1, H1),
      w2, s2.reshape(1, H2), t2.reshape(1, H2),
      w3, b3p.reshape(1, n_pad))

    return out_padded[:, :out_size]


# --------------------------- parameter creation ---------------------------

def init_mlp_params(key, inp_size, out_size):
    ks = jax.random.split(key, 14)

    def lin(kw, kb, fi, fo):
        std = 1.0 / math.sqrt(fi)
        # Stored already transposed: (in, out).
        w = jax.random.uniform(kw, (fi, fo), jnp.float32, -std, std)
        b = jax.random.uniform(kb, (fo,), jnp.float32, -std, std)
        return w, b

    w1, b1 = lin(ks[0], ks[1], inp_size, H1)
    w2, b2 = lin(ks[2], ks[3], H1, H2)
    w3, b3 = lin(ks[4], ks[5], H2, out_size)
    return dict(
        w1=w1, b1=b1,
        bn1_gamma=1.0 + 0.1 * jax.random.normal(ks[6], (H1,), jnp.float32),
        bn1_beta=0.1 * jax.random.normal(ks[7], (H1,), jnp.float32),
        bn1_mean=0.1 * jax.random.normal(ks[8], (H1,), jnp.float32),
        bn1_var=1.0 + 0.1 * jnp.abs(jax.random.normal(ks[9], (H1,), jnp.float32)),
        w2=w2, b2=b2,
        bn2_gamma=1.0 + 0.1 * jax.random.normal(ks[10], (H2,), jnp.float32),
        bn2_beta=0.1 * jax.random.normal(ks[11], (H2,), jnp.float32),
        bn2_mean=0.1 * jax.random.normal(ks[12], (H2,), jnp.float32),
        bn2_var=1.0 + 0.1 * jnp.abs(jax.random.normal(ks[13], (H2,), jnp.float32)),
        w3=w3, b3=b3,
    )


# ------------------------- pure-JAX reference (f32) ------------------------

def reference_forward(p, x):
    def bn(h, gamma, beta, mean, var, eps=1e-5):
        return (h - mean) * jax.lax.rsqrt(var + eps) * gamma + beta

    h = x @ p['w1'] + p['b1']
    h = jnp.maximum(bn(h, p['bn1_gamma'], p['bn1_beta'], p['bn1_mean'], p['bn1_var']), 0.0)
    h = h @ p['w2'] + p['b2']
    h = jnp.maximum(bn(h, p['bn2_gamma'], p['bn2_beta'], p['bn2_mean'], p['bn2_var']), 0.0)
    return h @ p['w3'] + p['b3']


# ---------------------------------- main ----------------------------------

if __name__ == "__main__":
    # TODO(synk): training-mode Dropout and batch-statistics BatchNorm are not
    # modeled (inference semantics only: dropout==identity, BN uses running stats).
    B = 2
    inp_size = 192
    out_size = 5

    key = jax.random.PRNGKey(0)
    k_params, k_data = jax.random.split(key)
    params = init_mlp_params(k_params, inp_size, out_size)
    x = jax.random.normal(k_data, (B, inp_size), jnp.float32)

    out = jax.jit(mlp_classification_forward)(params, x)
    out = jax.block_until_ready(out)

    assert out.shape == (B, out_size), out.shape
    assert bool(jnp.all(jnp.isfinite(out)))

    # Loose tolerance: kernel streams bf16 weights (f32 accumulation).
    ref = reference_forward(params, x)
    assert bool(jnp.max(jnp.abs(out - ref)) < 5e-2), float(jnp.max(jnp.abs(out - ref)))

    print("KERNEL_OK")
</pallas_src>

<mosaic_0001>
module attributes {stable_mosaic.version = 11 : i64} {
  func.func @_mlp_kernel(%arg0: i32, %arg1: memref<2x192xf32, #tpu.memory_space<vmem>>, %arg2: memref<192x1024xbf16, #tpu.memory_space<vmem>>, %arg3: memref<1x1024xf32, #tpu.memory_space<vmem>>, %arg4: memref<1x1024xf32, #tpu.memory_space<vmem>>, %arg5: memref<1024x512xbf16, #tpu.memory_space<vmem>>, %arg6: memref<1x512xf32, #tpu.memory_space<vmem>>, %arg7: memref<1x512xf32, #tpu.memory_space<vmem>>, %arg8: memref<512x128xbf16, #tpu.memory_space<vmem>>, %arg9: memref<1x128xf32, #tpu.memory_space<vmem>>, %arg10: memref<2x128xf32, #tpu.memory_space<vmem>>) attributes {dimension_semantics = [#tpu.dimension_semantics<arbitrary>], iteration_bounds = array<i64: 1>, scalar_prefetch = 0 : i64, scratch_operands = 0 : i64, tpu.core_type = #tpu.core_type<tc>, window_params = [{pipeline_mode = #tpu.pipeline_mode<synchronous>, transform_indices = @transform_0, window_bounds = array<i64: 2, 192>}, {pipeline_mode = #tpu.pipeline_mode<synchronous>, transform_indices = @transform_1, window_bounds = array<i64: 192, 1024>}, {pipeline_mode = #tpu.pipeline_mode<synchronous>, transform_indices = @transform_2, window_bounds = array<i64: 1, 1024>}, {pipeline_mode = #tpu.pipeline_mode<synchronous>, transform_indices = @transform_3, window_bounds = array<i64: 1, 1024>}, {pipeline_mode = #tpu.pipeline_mode<synchronous>, transform_indices = @transform_4, window_bounds = array<i64: 1024, 512>}, {pipeline_mode = #tpu.pipeline_mode<synchronous>, transform_indices = @transform_5, window_bounds = array<i64: 1, 512>}, {pipeline_mode = #tpu.pipeline_mode<synchronous>, transform_indices = @transform_6, window_bounds = array<i64: 1, 512>}, {pipeline_mode = #tpu.pipeline_mode<synchronous>, transform_indices = @transform_7, window_bounds = array<i64: 512, 128>}, {pipeline_mode = #tpu.pipeline_mode<synchronous>, transform_indices = @transform_8, window_bounds = array<i64: 1, 128>}, {pipeline_mode = #tpu.pipeline_mode<synchronous>, transform_indices = @transform_9, window_bounds = array<i64: 2, 128>}]} {
    %c0 = arith.constant 0 : index
    %c0_0 = arith.constant 0 : index
    %0 = vector.load %arg1[%c0, %c0_0] : memref<2x192xf32, #tpu.memory_space<vmem>>, vector<2x192xf32>
    %1 = arith.truncf %0 : vector<2x192xf32> to vector<2x192xbf16>
    %c0_1 = arith.constant 0 : index
    %c0_2 = arith.constant 0 : index
    %2 = vector.load %arg2[%c0_1, %c0_2] : memref<192x1024xbf16, #tpu.memory_space<vmem>>, vector<192x1024xbf16>
    %cst = arith.constant dense<0.000000e+00> : vector<2x1024xf32>
    %3 = tpu.matmul %1, %2, %cst {dimension_numbers = #tpu.dot_dimension_numbers<[1], [0], [0], [1], [0, 0, 1, 1], [], []>} : vector<2x192xbf16>, vector<192x1024xbf16>, vector<2x1024xf32> -> vector<2x1024xf32>
    %c0_3 = arith.constant 0 : index
    %c0_4 = arith.constant 0 : index
    %4 = vector.load %arg3[%c0_3, %c0_4] : memref<1x1024xf32, #tpu.memory_space<vmem>>, vector<1x1024xf32>
    %5 = vector.broadcast %4 : vector<1x1024xf32> to vector<2x1024xf32>
    %6 = arith.mulf %3, %5 : vector<2x1024xf32>
    %c0_5 = arith.constant 0 : index
    %c0_6 = arith.constant 0 : index
    %7 = vector.load %arg4[%c0_5, %c0_6] : memref<1x1024xf32, #tpu.memory_space<vmem>>, vector<1x1024xf32>
    %8 = vector.broadcast %7 : vector<1x1024xf32> to vector<2x1024xf32>
    %9 = arith.addf %6, %8 : vector<2x1024xf32>
    %cst_7 = arith.constant 0.000000e+00 : f32
    %10 = vector.broadcast %cst_7 : f32 to vector<2x1024xf32>
    %11 = arith.maximumf %9, %10 : vector<2x1024xf32>
    %12 = arith.truncf %11 : vector<2x1024xf32> to vector<2x1024xbf16>
    %c0_8 = arith.constant 0 : index
    %c0_9 = arith.constant 0 : index
    %13 = vector.load %arg5[%c0_8, %c0_9] : memref<1024x512xbf16, #tpu.memory_space<vmem>>, vector<1024x512xbf16>
    %cst_10 = arith.constant dense<0.000000e+00> : vector<2x512xf32>
    %14 = tpu.matmul %12, %13, %cst_10 {dimension_numbers = #tpu.dot_dimension_numbers<[1], [0], [0], [1], [0, 0, 1, 1], [], []>} : vector<2x1024xbf16>, vector<1024x512xbf16>, vector<2x512xf32> -> vector<2x512xf32>
    %c0_11 = arith.constant 0 : index
    %c0_12 = arith.constant 0 : index
    %15 = vector.load %arg6[%c0_11, %c0_12] : memref<1x512xf32, #tpu.memory_space<vmem>>, vector<1x512xf32>
    %16 = vector.broadcast %15 : vector<1x512xf32> to vector<2x512xf32>
    %17 = arith.mulf %14, %16 : vector<2x512xf32>
    %c0_13 = arith.constant 0 : index
    %c0_14 = arith.constant 0 : index
    %18 = vector.load %arg7[%c0_13, %c0_14] : memref<1x512xf32, #tpu.memory_space<vmem>>, vector<1x512xf32>
    %19 = vector.broadcast %18 : vector<1x512xf32> to vector<2x512xf32>
    %20 = arith.addf %17, %19 : vector<2x512xf32>
    %cst_15 = arith.constant 0.000000e+00 : f32
    %21 = vector.broadcast %cst_15 : f32 to vector<2x512xf32>
    %22 = arith.maximumf %20, %21 : vector<2x512xf32>
    %23 = arith.truncf %22 : vector<2x512xf32> to vector<2x512xbf16>
    %c0_16 = arith.constant 0 : index
    %c0_17 = arith.constant 0 : index
    %24 = vector.load %arg8[%c0_16, %c0_17] : memref<512x128xbf16, #tpu.memory_space<vmem>>, vector<512x128xbf16>
    %cst_18 = arith.constant dense<0.000000e+00> : vector<2x128xf32>
    %25 = tpu.matmul %23, %24, %cst_18 {dimension_numbers = #tpu.dot_dimension_numbers<[1], [0], [0], [1], [0, 0, 1, 1], [], []>} : vector<2x512xbf16>, vector<512x128xbf16>, vector<2x128xf32> -> vector<2x128xf32>
    %c0_19 = arith.constant 0 : index
    %c0_20 = arith.constant 0 : index
    %26 = vector.load %arg9[%c0_19, %c0_20] : memref<1x128xf32, #tpu.memory_space<vmem>>, vector<1x128xf32>
    %27 = vector.broadcast %26 : vector<1x128xf32> to vector<2x128xf32>
    %28 = arith.addf %25, %27 : vector<2x128xf32>
    %c0_21 = arith.constant 0 : index
    %c0_22 = arith.constant 0 : index
    %29 = vector.load %arg10[%c0_21, %c0_22] : memref<2x128xf32, #tpu.memory_space<vmem>>, vector<2x128xf32>
    tpu.vector_store %arg10[%c0_21, %c0_22], %28 {strides = array<i32>} : memref<2x128xf32, #tpu.memory_space<vmem>>, vector<2x128xf32>,
    return
  }
  func.func @transform_0(%arg0: i32) -> (i32, i32) {
    %c0_i32 = arith.constant 0 : i32
    %c0_i32_0 = arith.constant 0 : i32
    %c0_i32_1 = arith.constant 0 : i32
    return %c0_i32, %c0_i32_0 : i32, i32
  }
  func.func @transform_1(%arg0: i32) -> (i32, i32) {
    %c0_i32 = arith.constant 0 : i32
    %c0_i32_0 = arith.constant 0 : i32
    %c0_i32_1 = arith.constant 0 : i32
    return %c0_i32, %c0_i32_0 : i32, i32
  }
  func.func @transform_2(%arg0: i32) -> (i32, i32) {
    %c0_i32 = arith.constant 0 : i32
    %c0_i32_0 = arith.constant 0 : i32
    %c0_i32_1 = arith.constant 0 : i32
    return %c0_i32, %c0_i32_0 : i32, i32
  }
  func.func @transform_3(%arg0: i32) -> (i32, i32) {
    %c0_i32 = arith.constant 0 : i32
    %c0_i32_0 = arith.constant 0 : i32
    %c0_i32_1 = arith.constant 0 : i32
    return %c0_i32, %c0_i32_0 : i32, i32
  }
  func.func @transform_4(%arg0: i32) -> (i32, i32) {
    %c0_i32 = arith.constant 0 : i32
    %c0_i32_0 = arith.constant 0 : i32
    %c0_i32_1 = arith.constant 0 : i32
    return %c0_i32, %c0_i32_0 : i32, i32
  }
  func.func @transform_5(%arg0: i32) -> (i32, i32) {
    %c0_i32 = arith.constant 0 : i32
    %c0_i32_0 = arith.constant 0 : i32
    %c0_i32_1 = arith.constant 0 : i32
    return %c0_i32, %c0_i32_0 : i32, i32
  }
  func.func @transform_6(%arg0: i32) -> (i32, i32) {
    %c0_i32 = arith.constant 0 : i32
    %c0_i32_0 = arith.constant 0 : i32
    %c0_i32_1 = arith.constant 0 : i32
    return %c0_i32, %c0_i32_0 : i32, i32
  }
  func.func @transform_7(%arg0: i32) -> (i32, i32) {
    %c0_i32 = arith.constant 0 : i32
    %c0_i32_0 = arith.constant 0 : i32
    %c0_i32_1 = arith.constant 0 : i32
    return %c0_i32, %c0_i32_0 : i32, i32
  }
  func.func @transform_8(%arg0: i32) -> (i32, i32) {
    %c0_i32 = arith.constant 0 : i32
    %c0_i32_0 = arith.constant 0 : i32
    %c0_i32_1 = arith.constant 0 : i32
    return %c0_i32, %c0_i32_0 : i32, i32
  }
  func.func @transform_9(%arg0: i32) -> (i32, i32) {
    %c0_i32 = arith.constant 0 : i32
    %c0_i32_0 = arith.constant 0 : i32
    %c0_i32_1 = arith.constant 0 : i32
    return %c0_i32, %c0_i32_0 : i32, i32
  }
}

</mosaic_0001>

<llo_original>
// kernel: mlp_classification_forward.1
$region0: #{mlp_classification_forward.1}
  #allocation0 [shape = 'u32[]', space=smem, size = 0x4, offset = 0x4, fixed_abs, tag = 'smem constant byte address 0x4 - core index']
  #allocation1 [shape = 'u32[144,128]{1,0:T(1,128)}', space=vmem, size = 0x12000, scoped, tag = 'internal scratch']
  %s0 = inlined_call_operand.vmem [shape: f32[2,192], index: 0, kind: input, shape index: {}]
  %s1 = inlined_call_operand.vmem [shape: bf16[192,1024], index: 1, kind: input, shape index: {}]
  %s2 = inlined_call_operand.vmem [shape: f32[1,1024], index: 2, kind: input, shape index: {}]
  %s3 = inlined_call_operand.vmem [shape: f32[1,1024], index: 3, kind: input, shape index: {}]
  %s4 = inlined_call_operand.vmem [shape: bf16[1024,512], index: 4, kind: input, shape index: {}]
  %s5 = inlined_call_operand.vmem [shape: f32[1,512], index: 5, kind: input, shape index: {}]
  %s6 = inlined_call_operand.vmem [shape: f32[1,512], index: 6, kind: input, shape index: {}]
  %s7 = inlined_call_operand.vmem [shape: bf16[512,128], index: 7, kind: input, shape index: {}]
  %s8 = inlined_call_operand.vmem [shape: f32[1,128], index: 8, kind: input, shape index: {}]
  %s9 = inlined_call_operand.hbm [shape: f32[2,128], index: 9, kind: output, shape index: {}]
  %s10 = sld [smem:[#allocation0]]
  $region46: #{mlp_classification_forward.1} parent=0
    _
  %s12 = ssub.s32 1, %s10
  %s13 = scalar_select 0, %s12, %s10
  $region1: #{mlp_classification_forward.1} parent=0
    #allocation2 [shape = 'u8[1024]{0}', space=vmem, size = 0x400, scoped, tag = 'output window, operand 0, single buffered']
    #allocation3 [shape = 's32[1]{0}', space=sflag, size = 0x4, scoped, tag = 'scoped memory for mlp_classification_forward.1']
    %14 = vsyncpa [#allocation3], 0
    // Predicated region
    $region2: #{mlp_classification_forward.1} parent=1 // pred_check
      _
    $region3: #{mlp_classification_forward.1} parent=1 // pred_check_branch
      %16 = sbr.rel (0) target = $region5
    $region4: #{mlp_classification_forward.1} parent=1 // pred_region
      _
    $region5: #{mlp_classification_forward.1} parent=1 // pred_fallthru
      _
    // Predicated region
    $region6: #{mlp_classification_forward.1} parent=1 // pred_check
      _
    $region7: #{mlp_classification_forward.1} parent=1 // pred_check_branch
      %18 = sbr.rel (0) target = $region9
    $region8: #{mlp_classification_forward.1} parent=1 // pred_region
      _
    $region9: #{mlp_classification_forward.1} parent=1 // pred_fallthru
      _
    // Predicated region
    $region10: #{mlp_classification_forward.1} parent=1 // pred_check
      _
    $region11: #{mlp_classification_forward.1} parent=1 // pred_check_branch
      %20 = sbr.rel (0) target = $region13
    $region12: #{mlp_classification_forward.1} parent=1 // pred_region
      _
    $region13: #{mlp_classification_forward.1} parent=1 // pred_fallthru
      _
    // Predicated region
    $region14: #{mlp_classification_forward.1} parent=1 // pred_check
      _
    $region15: #{mlp_classification_forward.1} parent=1 // pred_check_branch
      %22 = sbr.rel (0) target = $region17
    $region16: #{mlp_classification_forward.1} parent=1 // pred_region
      _
    $region17: #{mlp_classification_forward.1} parent=1 // pred_fallthru
      _
    // Predicated region
    $region18: #{mlp_classification_forward.1} parent=1 // pred_check
      _
    $region19: #{mlp_classification_forward.1} parent=1 // pred_check_branch
      %24 = sbr.rel (0) target = $region21
    $region20: #{mlp_classification_forward.1} parent=1 // pred_region
      _
    $region21: #{mlp_classification_forward.1} parent=1 // pred_fallthru
      _
    // Predicated region
    $region22: #{mlp_classification_forward.1} parent=1 // pred_check
      _
    $region23: #{mlp_classification_forward.1} parent=1 // pred_check_branch
      %26 = sbr.rel (0) target = $region25
    $region24: #{mlp_classification_forward.1} parent=1 // pred_region
      _
    $region25: #{mlp_classification_forward.1} parent=1 // pred_fallthru
      _
    // Predicated region
    $region26: #{mlp_classification_forward.1} parent=1 // pred_check
      _
    $region27: #{mlp_classification_forward.1} parent=1 // pred_check_branch
      %28 = sbr.rel (0) target = $region29
    $region28: #{mlp_classification_forward.1} parent=1 // pred_region
      _
    $region29: #{mlp_classification_forward.1} parent=1 // pred_fallthru
      _
    // Predicated region
    $region30: #{mlp_classification_forward.1} parent=1 // pred_check
      _
    $region31: #{mlp_classification_forward.1} parent=1 // pred_check_branch
      %30 = sbr.rel (0) target = $region33
    $region32: #{mlp_classification_forward.1} parent=1 // pred_region
      _
    $region33: #{mlp_classification_forward.1} parent=1 // pred_fallthru
      _
    // Predicated region
    $region34: #{mlp_classification_forward.1} parent=1 // pred_check
      _
    $region35: #{mlp_classification_forward.1} parent=1 // pred_check_branch
      %32 = sbr.rel (0) target = $region37
    $region36: #{mlp_classification_forward.1} parent=1 // pred_region
      _
    $region37: #{mlp_classification_forward.1} parent=1 // pred_fallthru
      _
    %v34 = vld [vmem:[%s0] sm:$0xf]
    %v37 = vunpack.c.l.s4 1983009808
    %v38 = vunpack.c.0.s8 %v37
    %v39 = vlaneseq
    %v40 = vshrl.u32 %v39, 7
    %v41 = vsub.s32 %v38, %v40
    %v42 = vrot.slane %v34, %v41
    %v43 = vcombine.high %v42, %v42
    %v46 = vpack.c.bf16 %v42, %v42
    %v47 = vpack.c.bf16 %v43, %v43
    %v48 = vld [vmem:[%s1] sm:$0xff]
    %v49 = vld [vmem:[%s1 + $0x8] sm:$0xff]
    %v50 = vld [vmem:[%s1 + $0x10] sm:$0xff]
    %v51 = vld [vmem:[%s1 + $0x18] sm:$0xff]
    %v52 = vld [vmem:[%s1 + $0x20] sm:$0xff]
    %v53 = vld [vmem:[%s1 + $0x28] sm:$0xff]
    %v54 = vld [vmem:[%s1 + $0x30] sm:$0xff]
    %v55 = vld [vmem:[%s1 + $0x38] sm:$0xff]
    %v56 = vld [vmem:[%s1 + $0x40] sm:$0xff]
    %v57 = vld [vmem:[%s1 + $0x48] sm:$0xff]
    %v58 = vld [vmem:[%s1 + $0x50] sm:$0xff]
    %v59 = vld [vmem:[%s1 + $0x58] sm:$0xff]
    %v60 = vld [vmem:[%s1 + $0x60] sm:$0xff]
    %v61 = vld [vmem:[%s1 + $0x68] sm:$0xff]
    %v62 = vld [vmem:[%s1 + $0x70] sm:$0xff]
    %v63 = vld [vmem:[%s1 + $0x78] sm:$0xff]
    %v64 = vld [vmem:[%s1 + $0x80] sm:$0xff]
    %v65 = vld [vmem:[%s1 + $0x88] sm:$0xff]
    %v66 = vld [vmem:[%s1 + $0x90] sm:$0xff]
    %v67 = vld [vmem:[%s1 + $0x98] sm:$0xff]
    %v68 = vld [vmem:[%s1 + $0xa0] sm:$0xff]
    %v69 = vld [vmem:[%s1 + $0xa8] sm:$0xff]
    %v70 = vld [vmem:[%s1 + $0xb0] sm:$0xff]
    %v71 = vld [vmem:[%s1 + $0xb8] sm:$0xff]
    %v72 = vld [vmem:[%s1 + $0xc0] sm:$0xff]
    %v73 = vld [vmem:[%s1 + $0xc8] sm:$0xff]
    %v74 = vld [vmem:[%s1 + $0xd0] sm:$0xff]
    %v75 = vld [vmem:[%s1 + $0xd8] sm:$0xff]
    %v76 = vld [vmem:[%s1 + $0xe0] sm:$0xff]
    %v77 = vld [vmem:[%s1 + $0xe8] sm:$0xff]
    %v78 = vld [vmem:[%s1 + $0xf0] sm:$0xff]
    %v79 = vld [vmem:[%s1 + $0xf8] sm:$0xff]
    %v80 = vld [vmem:[%s1 + $0x100] sm:$0xff]
    %v81 = vld [vmem:[%s1 + $0x108] sm:$0xff]
    %v82 = vld [vmem:[%s1 + $0x110] sm:$0xff]
    %v83 = vld [vmem:[%s1 + $0x118] sm:$0xff]
    %v84 = vld [vmem:[%s1 + $0x120] sm:$0xff]
    %v85 = vld [vmem:[%s1 + $0x128] sm:$0xff]
    %v86 = vld [vmem:[%s1 + $0x130] sm:$0xff]
    %v87 = vld [vmem:[%s1 + $0x138] sm:$0xff]
    %v88 = vld [vmem:[%s1 + $0x140] sm:$0xff]
    %v89 = vld [vmem:[%s1 + $0x148] sm:$0xff]
    %v90 = vld [vmem:[%s1 + $0x150] sm:$0xff]
    %v91 = vld [vmem:[%s1 + $0x158] sm:$0xff]
    %v92 = vld [vmem:[%s1 + $0x160] sm:$0xff]
    %v93 = vld [vmem:[%s1 + $0x168] sm:$0xff]
    %v94 = vld [vmem:[%s1 + $0x170] sm:$0xff]
    %v95 = vld [vmem:[%s1 + $0x178] sm:$0xff]
    %v96 = vld [vmem:[%s1 + $0x180] sm:$0xff]
    %v97 = vld [vmem:[%s1 + $0x188] sm:$0xff]
    %v98 = vld [vmem:[%s1 + $0x190] sm:$0xff]
    %v99 = vld [vmem:[%s1 + $0x198] sm:$0xff]
    %v100 = vld [vmem:[%s1 + $0x1a0] sm:$0xff]
    %v101 = vld [vmem:[%s1 + $0x1a8] sm:$0xff]
    %v102 = vld [vmem:[%s1 + $0x1b0] sm:$0xff]
    %v103 = vld [vmem:[%s1 + $0x1b8] sm:$0xff]
    %v104 = vld [vmem:[%s1 + $0x1c0] sm:$0xff]
    %v105 = vld [vmem:[%s1 + $0x1c8] sm:$0xff]
    %v106 = vld [vmem:[%s1 + $0x1d0] sm:$0xff]
    %v107 = vld [vmem:[%s1 + $0x1d8] sm:$0xff]
    %v108 = vld [vmem:[%s1 + $0x1e0] sm:$0xff]
    %v109 = vld [vmem:[%s1 + $0x1e8] sm:$0xff]
    %v110 = vld [vmem:[%s1 + $0x1f0] sm:$0xff]
    %v111 = vld [vmem:[%s1 + $0x1f8] sm:$0xff]
    %v112 = vld [vmem:[%s1 + $0x200] sm:$0xff]
    %v113 = vld [vmem:[%s1 + $0x208] sm:$0xff]
    %v114 = vld [vmem:[%s1 + $0x210] sm:$0xff]
    %v115 = vld [vmem:[%s1 + $0x218] sm:$0xff]
    %v116 = vld [vmem:[%s1 + $0x220] sm:$0xff]
    %v117 = vld [vmem:[%s1 + $0x228] sm:$0xff]
    %v118 = vld [vmem:[%s1 + $0x230] sm:$0xff]
    %v119 = vld [vmem:[%s1 + $0x238] sm:$0xff]
    %v120 = vld [vmem:[%s1 + $0x240] sm:$0xff]
    %v121 = vld [vmem:[%s1 + $0x248] sm:$0xff]
    %v122 = vld [vmem:[%s1 + $0x250] sm:$0xff]
    %v123 = vld [vmem:[%s1 + $0x258] sm:$0xff]
    %v124 = vld [vmem:[%s1 + $0x260] sm:$0xff]
    %v125 = vld [vmem:[%s1 + $0x268] sm:$0xff]
    %v126 = vld [vmem:[%s1 + $0x270] sm:$0xff]
    %v127 = vld [vmem:[%s1 + $0x278] sm:$0xff]
    %v128 = vld [vmem:[%s1 + $0x280] sm:$0xff]
    %v129 = vld [vmem:[%s1 + $0x288] sm:$0xff]
    %v130 = vld [vmem:[%s1 + $0x290] sm:$0xff]
    %v131 = vld [vmem:[%s1 + $0x298] sm:$0xff]
    %v132 = vld [vmem:[%s1 + $0x2a0] sm:$0xff]
    %v133 = vld [vmem:[%s1 + $0x2a8] sm:$0xff]
    %v134 = vld [vmem:[%s1 + $0x2b0] sm:$0xff]
    %v135 = vld [vmem:[%s1 + $0x2b8] sm:$0xff]
    %v136 = vld [vmem:[%s1 + $0x2c0] sm:$0xff]
    %v137 = vld [vmem:[%s1 + $0x2c8] sm:$0xff]
    %v138 = vld [vmem:[%s1 + $0x2d0] sm:$0xff]
    %v139 = vld [vmem:[%s1 + $0x2d8] sm:$0xff]
    %v140 = vld [vmem:[%s1 + $0x2e0] sm:$0xff]
    %v141 = vld [vmem:[%s1 + $0x2e8] sm:$0xff]
    %v142 = vld [vmem:[%s1 + $0x2f0] sm:$0xff]
    %v143 = vld [vmem:[%s1 + $0x2f8] sm:$0xff]
    %v240 = vunpack.c.l.b16 %v48
    %v241 = vunpack.c.h.b16 %v48
    %v242 = vunpack.c.l.b16 %v49
    %v243 = vunpack.c.h.b16 %v49
    %v244 = vunpack.c.l.b16 %v50
    %v245 = vunpack.c.h.b16 %v50
    %v246 = vunpack.c.l.b16 %v51
    %v247 = vunpack.c.h.b16 %v51
    %v248 = vunpack.c.l.b16 %v52
    %v249 = vunpack.c.h.b16 %v52
    %v250 = vunpack.c.l.b16 %v53
    %v251 = vunpack.c.h.b16 %v53
    %v252 = vunpack.c.l.b16 %v54
    %v253 = vunpack.c.h.b16 %v54
    %v254 = vunpack.c.l.b16 %v55
    %v255 = vunpack.c.h.b16 %v55
    %v256 = vunpack.c.l.b16 %v56
    %v257 = vunpack.c.h.b16 %v56
    %v258 = vunpack.c.l.b16 %v57
    %v259 = vunpack.c.h.b16 %v57
    %v260 = vunpack.c.l.b16 %v58
    %v261 = vunpack.c.h.b16 %v58
    %v262 = vunpack.c.l.b16 %v59
    %v263 = vunpack.c.h.b16 %v59
    %v264 = vunpack.c.l.b16 %v60
    %v265 = vunpack.c.h.b16 %v60
    %v266 = vunpack.c.l.b16 %v61
    %v267 = vunpack.c.h.b16 %v61
    %v268 = vunpack.c.l.b16 %v62
    %v269 = vunpack.c.h.b16 %v62
    %v270 = vunpack.c.l.b16 %v63
    %v271 = vunpack.c.h.b16 %v63
    %v272 = vunpack.c.l.b16 %v64
    %v273 = vunpack.c.h.b16 %v64
    %v274 = vunpack.c.l.b16 %v65
    %v275 = vunpack.c.h.b16 %v65
    %v276 = vunpack.c.l.b16 %v66
    %v277 = vunpack.c.h.b16 %v66
    %v278 = vunpack.c.l.b16 %v67
    %v279 = vunpack.c.h.b16 %v67
    %v280 = vunpack.c.l.b16 %v68
    %v281 = vunpack.c.h.b16 %v68
    %v282 = vunpack.c.l.b16 %v69
    %v283 = vunpack.c.h.b16 %v69
    %v284 = vunpack.c.l.b16 %v70
    %v285 = vunpack.c.h.b16 %v70
    %v286 = vunpack.c.l.b16 %v71
    %v287 = vunpack.c.h.b16 %v71
    %v288 = vunpack.c.l.b16 %v72
    %v289 = vunpack.c.h.b16 %v72
    %v290 = vunpack.c.l.b16 %v73
    %v291 = vunpack.c.h.b16 %v73
    %v292 = vunpack.c.l.b16 %v74
    %v293 = vunpack.c.h.b16 %v74
    %v294 = vunpack.c.l.b16 %v75
    %v295 = vunpack.c.h.b16 %v75
    %v296 = vunpack.c.l.b16 %v76
    %v297 = vunpack.c.h.b16 %v76
    %v298 = vunpack.c.l.b16 %v77
    %v299 = vunpack.c.h.b16 %v77
    %v300 = vunpack.c.l.b16 %v78
    %v301 = vunpack.c.h.b16 %v78
    %v302 = vunpack.c.l.b16 %v79
    %v303 = vunpack.c.h.b16 %v79
    %v304 = vunpack.c.l.b16 %v80
    %v305 = vunpack.c.h.b16 %v80
    %v306 = vunpack.c.l.b16 %v81
    %v307 = vunpack.c.h.b16 %v81
    %v308 = vunpack.c.l.b16 %v82
    %v309 = vunpack.c.h.b16 %v82
    %v310 = vunpack.c.l.b16 %v83
    %v311 = vunpack.c.h.b16 %v83
    %v312 = vunpack.c.l.b16 %v84
    %v313 = vunpack.c.h.b16 %v84
    %v314 = vunpack.c.l.b16 %v85
    %v315 = vunpack.c.h.b16 %v85
    %v316 = vunpack.c.l.b16 %v86
    %v317 = vunpack.c.h.b16 %v86
    %v318 = vunpack.c.l.b16 %v87
    %v319 = vunpack.c.h.b16 %v87
    %v320 = vunpack.c.l.b16 %v88
    %v321 = vunpack.c.h.b16 %v88
    %v322 = vunpack.c.l.b16 %v89
    %v323 = vunpack.c.h.b16 %v89
    %v324 = vunpack.c.l.b16 %v90
    %v325 = vunpack.c.h.b16 %v90
    %v326 = vunpack.c.l.b16 %v91
    %v327 = vunpack.c.h.b16 %v91
    %v328 = vunpack.c.l.b16 %v92
    %v329 = vunpack.c.h.b16 %v92
    %v330 = vunpack.c.l.b16 %v93
    %v331 = vunpack.c.h.b16 %v93
    %v332 = vunpack.c.l.b16 %v94
    %v333 = vunpack.c.h.b16 %v94
    %v334 = vunpack.c.l.b16 %v95
    %v335 = vunpack.c.h.b16 %v95
    %v336 = vunpack.c.l.b16 %v96
    %v337 = vunpack.c.h.b16 %v96
    %v338 = vunpack.c.l.b16 %v97
    %v339 = vunpack.c.h.b16 %v97
    %v340 = vunpack.c.l.b16 %v98
    %v341 = vunpack.c.h.b16 %v98
    %v342 = vunpack.c.l.b16 %v99
    %v343 = vunpack.c.h.b16 %v99
    %v344 = vunpack.c.l.b16 %v100
    %v345 = vunpack.c.h.b16 %v100
    %v346 = vunpack.c.l.b16 %v101
    %v347 = vunpack.c.h.b16 %v101
    %v348 = vunpack.c.l.b16 %v102
    %v349 = vunpack.c.h.b16 %v102
    %v350 = vunpack.c.l.b16 %v103
    %v351 = vunpack.c.h.b16 %v103
    %v352 = vunpack.c.l.b16 %v104
    %v353 = vunpack.c.h.b16 %v104
    %v354 = vunpack.c.l.b16 %v105
    %v355 = vunpack.c.h.b16 %v105
    %v356 = vunpack.c.l.b16 %v106
    %v357 = vunpack.c.h.b16 %v106
    %v358 = vunpack.c.l.b16 %v107
    %v359 = vunpack.c.h.b16 %v107
    %v360 = vunpack.c.l.b16 %v108
    %v361 = vunpack.c.h.b16 %v108
    %v362 = vunpack.c.l.b16 %v109
    %v363 = vunpack.c.h.b16 %v109
    %v364 = vunpack.c.l.b16 %v110
    %v365 = vunpack.c.h.b16 %v110
    %v366 = vunpack.c.l.b16 %v111
    %v367 = vunpack.c.h.b16 %v111
    %v368 = vunpack.c.l.b16 %v112
    %v369 = vunpack.c.h.b16 %v112
    %v370 = vunpack.c.l.b16 %v113
    %v371 = vunpack.c.h.b16 %v113
    %v372 = vunpack.c.l.b16 %v114
    %v373 = vunpack.c.h.b16 %v114
    %v374 = vunpack.c.l.b16 %v115
    %v375 = vunpack.c.h.b16 %v115
    %v376 = vunpack.c.l.b16 %v116
    %v377 = vunpack.c.h.b16 %v116
    %v378 = vunpack.c.l.b16 %v117
    %v379 = vunpack.c.h.b16 %v117
    %v380 = vunpack.c.l.b16 %v118
    %v381 = vunpack.c.h.b16 %v118
    %v382 = vunpack.c.l.b16 %v119
    %v383 = vunpack.c.h.b16 %v119
    %v384 = vunpack.c.l.b16 %v120
    %v385 = vunpack.c.h.b16 %v120
    %v386 = vunpack.c.l.b16 %v121
    %v387 = vunpack.c.h.b16 %v121
    %v388 = vunpack.c.l.b16 %v122
    %v389 = vunpack.c.h.b16 %v122
    %v390 = vunpack.c.l.b16 %v123
    %v391 = vunpack.c.h.b16 %v123
    %v392 = vunpack.c.l.b16 %v124
    %v393 = vunpack.c.h.b16 %v124
    %v394 = vunpack.c.l.b16 %v125
    %v395 = vunpack.c.h.b16 %v125
    %v396 = vunpack.c.l.b16 %v126
    %v397 = vunpack.c.h.b16 %v126
    %v398 = vunpack.c.l.b16 %v127
    %v399 = vunpack.c.h.b16 %v127
    %v400 = vunpack.c.l.b16 %v128
    %v401 = vunpack.c.h.b16 %v128
    %v402 = vunpack.c.l.b16 %v129
    %v403 = vunpack.c.h.b16 %v129
    %v404 = vunpack.c.l.b16 %v130
    %v405 = vunpack.c.h.b16 %v130
    %v406 = vunpack.c.l.b16 %v131
    %v407 = vunpack.c.h.b16 %v131
    %v408 = vunpack.c.l.b16 %v132
    %v409 = vunpack.c.h.b16 %v132
    %v410 = vunpack.c.l.b16 %v133
    %v411 = vunpack.c.h.b16 %v133
    %v412 = vunpack.c.l.b16 %v134
    %v413 = vunpack.c.h.b16 %v134
    %v414 = vunpack.c.l.b16 %v135
    %v415 = vunpack.c.h.b16 %v135
    %v416 = vunpack.c.l.b16 %v136
    %v417 = vunpack.c.h.b16 %v136
    %v418 = vunpack.c.l.b16 %v137
    %v419 = vunpack.c.h.b16 %v137
    %v420 = vunpack.c.l.b16 %v138
    %v421 = vunpack.c.h.b16 %v138
    %v422 = vunpack.c.l.b16 %v139
    %v423 = vunpack.c.h.b16 %v139
    %v424 = vunpack.c.l.b16 %v140
    %v425 = vunpack.c.h.b16 %v140
    %v426 = vunpack.c.l.b16 %v141
    %v427 = vunpack.c.h.b16 %v141
    %v428 = vunpack.c.l.b16 %v142
    %v429 = vunpack.c.h.b16 %v142
    %v430 = vunpack.c.l.b16 %v143
    %v431 = vunpack.c.h.b16 %v143
    %v432 = vpack.c.b16 %v248, %v240
    %v433 = vpack.c.b16 %v249, %v241
    %v434 = vpack.c.b16 %v250, %v242
    %v435 = vpack.c.b16 %v251, %v243
    %v436 = vpack.c.b16 %v252, %v244
    %v437 = vpack.c.b16 %v253, %v245
    %v438 = vpack.c.b16 %v254, %v246
    %v439 = vpack.c.b16 %v255, %v247
    %v440 = vpack.c.b16 %v264, %v256
    %v441 = vpack.c.b16 %v265, %v257
    %v442 = vpack.c.b16 %v266, %v258
    %v443 = vpack.c.b16 %v267, %v259
    %v444 = vpack.c.b16 %v268, %v260
    %v445 = vpack.c.b16 %v269, %v261
    %v446 = vpack.c.b16 %v270, %v262
    %v447 = vpack.c.b16 %v271, %v263
    %v448 = vpack.c.b16 %v280, %v272
    %v449 = vpack.c.b16 %v281, %v273
    %v450 = vpack.c.b16 %v282, %v274
    %v451 = vpack.c.b16 %v283, %v275
    %v452 = vpack.c.b16 %v284, %v276
    %v453 = vpack.c.b16 %v285, %v277
    %v454 = vpack.c.b16 %v286, %v278
    %v455 = vpack.c.b16 %v287, %v279
    %v456 = vpack.c.b16 %v296, %v288
    %v457 = vpack.c.b16 %v297, %v289
    %v458 = vpack.c.b16 %v298, %v290
    %v459 = vpack.c.b16 %v299, %v291
    %v460 = vpack.c.b16 %v300, %v292
    %v461 = vpack.c.b16 %v301, %v293
    %v462 = vpack.c.b16 %v302, %v294
    %v463 = vpack.c.b16 %v303, %v295
    %v464 = vpack.c.b16 %v312, %v304
    %v465 = vpack.c.b16 %v313, %v305
    %v466 = vpack.c.b16 %v314, %v306
    %v467 = vpack.c.b16 %v315, %v307
    %v468 = vpack.c.b16 %v316, %v308
    %v469 = vpack.c.b16 %v317, %v309
    %v470 = vpack.c.b16 %v318, %v310
    %v471 = vpack.c.b16 %v319, %v311
    %v472 = vpack.c.b16 %v328, %v320
    %v473 = vpack.c.b16 %v329, %v321
    %v474 = vpack.c.b16 %v330, %v322
    %v475 = vpack.c.b16 %v331, %v323
    %v476 = vpack.c.b16 %v332, %v324
    %v477 = vpack.c.b16 %v333, %v325
    %v478 = vpack.c.b16 %v334, %v326
    %v479 = vpack.c.b16 %v335, %v327
    %v480 = vpack.c.b16 %v344, %v336
    %v481 = vpack.c.b16 %v345, %v337
    %v482 = vpack.c.b16 %v346, %v338
    %v483 = vpack.c.b16 %v347, %v339
    %v484 = vpack.c.b16 %v348, %v340
    %v485 = vpack.c.b16 %v349, %v341
    %v486 = vpack.c.b16 %v350, %v342
    %v487 = vpack.c.b16 %v351, %v343
    %v488 = vpack.c.b16 %v360, %v352
    %v489 = vpack.c.b16 %v361, %v353
    %v490 = vpack.c.b16 %v362, %v354
    %v491 = vpack.c.b16 %v363, %v355
    %v492 = vpack.c.b16 %v364, %v356
    %v493 = vpack.c.b16 %v365, %v357
    %v494 = vpack.c.b16 %v366, %v358
    %v495 = vpack.c.b16 %v367, %v359
    %v496 = vpack.c.b16 %v376, %v368
    %v497 = vpack.c.b16 %v377, %v369
    %v498 = vpack.c.b16 %v378, %v370
    %v499 = vpack.c.b16 %v379, %v371
    %v500 = vpack.c.b16 %v380, %v372
    %v501 = vpack.c.b16 %v381, %v373
    %v502 = vpack.c.b16 %v382, %v374
    %v503 = vpack.c.b16 %v383, %v375
    %v504 = vpack.c.b16 %v392, %v384
    %v505 = vpack.c.b16 %v393, %v385
    %v506 = vpack.c.b16 %v394, %v386
    %v507 = vpack.c.b16 %v395, %v387
    %v508 = vpack.c.b16 %v396, %v388
    %v509 = vpack.c.b16 %v397, %v389
    %v510 = vpack.c.b16 %v398, %v390
    %v511 = vpack.c.b16 %v399, %v391
    %v512 = vpack.c.b16 %v408, %v400
    %v513 = vpack.c.b16 %v409, %v401
    %v514 = vpack.c.b16 %v410, %v402
    %v515 = vpack.c.b16 %v411, %v403
    %v516 = vpack.c.b16 %v412, %v404
    %v517 = vpack.c.b16 %v413, %v405
    %v518 = vpack.c.b16 %v414, %v406
    %v519 = vpack.c.b16 %v415, %v407
    %v520 = vpack.c.b16 %v424, %v416
    %v521 = vpack.c.b16 %v425, %v417
    %v522 = vpack.c.b16 %v426, %v418
    %v523 = vpack.c.b16 %v427, %v419
    %v524 = vpack.c.b16 %v428, %v420
    %v525 = vpack.c.b16 %v429, %v421
    %v526 = vpack.c.b16 %v430, %v422
    %v527 = vpack.c.b16 %v431, %v423
    %vm624 = vcmask 523264
    %v626 = vsel %vm624, %v47, 0
    %628 = vmatprep.subr.bf16.mxu0 %v489
    %629 = vmatpush1.bf16.msra.mxu0 %v488
    %630 = vmatprep.subr.bf16.mxu0 %v481
    %631 = vmatpush1.bf16.msra.mxu0 %v480
    %632 = vmatprep.subr.bf16.mxu0 %v473
    %633 = vmatpush1.bf16.msra.mxu0 %v472
    %634 = vmatprep.subr.bf16.mxu0 %v465
    %635 = vmatpush1.bf16.msra.mxu0 %v464
    %636 = vmatprep.subr.bf16.mxu0 %v457
    %637 = vmatpush1.bf16.msra.mxu0 %v456
    %638 = vmatprep.subr.bf16.mxu0 %v449
    %639 = vmatpush1.bf16.msra.mxu0 %v448
    %640 = vmatprep.subr.bf16.mxu0 %v441
    %641 = vmatpush1.bf16.msra.mxu0 %v440
    %642 = vmatprep.subr.bf16.mxu0 %v433
    %643 = vmatpush1.bf16.msra.mxu0 %v432
    %644 = vmatprep.subr.bf16.mxu0 0
    %645 = vmatpush2.bf16.msra.mxu0 0
    %646 = vmatprep.subr.bf16.mxu0 0
    %647 = vmatpush2.bf16.msra.mxu0 0
    %648 = vmatprep.subr.bf16.mxu0 0
    %649 = vmatpush2.bf16.msra.mxu0 0
    %650 = vmatprep.subr.bf16.mxu0 0
    %651 = vmatpush2.bf16.msra.mxu0 0
    %652 = vmatprep.subr.bf16.mxu0 %v521
    %653 = vmatpush2.bf16.msra.mxu0 %v520
    %654 = vmatprep.subr.bf16.mxu0 %v513
    %655 = vmatpush2.bf16.msra.mxu0 %v512
    %656 = vmatprep.subr.bf16.mxu0 %v505
    %657 = vmatpush2.bf16.msra.mxu0 %v504
    %658 = vmatprep.subr.bf16.mxu0 %v497
    %659 = vmatpush2.bf16.msra.mxu0 %v496
    %660 = vmatprep.mubr.bf16.mxu0 %v626
    %661 = vmatmul.mubr.bf16.gmra.mxu0 %v46
    %v662 = vpop.f32.mrf.mxu0
    %v663 = vadd.f32 0.0, %v662
    %v664 = vpop.f32.mrf.mxu0
    %v665 = vadd.f32 0.0, %v664
    %v666 = vpop.f32.mrf.mxu0
    %v667 = vpop.f32.mrf.mxu0
    %668 = vdwg.mxu0
    %669 = vmatprep.subr.bf16.mxu0 %v491
    %670 = vmatpush1.bf16.msra.mxu0 %v490
    %671 = vmatprep.subr.bf16.mxu0 %v483
    %672 = vmatpush1.bf16.msra.mxu0 %v482
    %673 = vmatprep.subr.bf16.mxu0 %v475
    %674 = vmatpush1.bf16.msra.mxu0 %v474
    %675 = vmatprep.subr.bf16.mxu0 %v467
    %676 = vmatpush1.bf16.msra.mxu0 %v466
    %677 = vmatprep.subr.bf16.mxu0 %v459
    %678 = vmatpush1.bf16.msra.mxu0 %v458
    %679 = vmatprep.subr.bf16.mxu0 %v451
    %680 = vmatpush1.bf16.msra.mxu0 %v450
    %681 = vmatprep.subr.bf16.mxu0 %v443
    %682 = vmatpush1.bf16.msra.mxu0 %v442
    %683 = vmatprep.subr.bf16.mxu0 %v435
    %684 = vmatpush1.bf16.msra.mxu0 %v434
    %685 = vmatprep.subr.bf16.mxu0 0
    %686 = vmatpush2.bf16.msra.mxu0 0
    %687 = vmatprep.subr.bf16.mxu0 0
    %688 = vmatpush2.bf16.msra.mxu0 0
    %689 = vmatprep.subr.bf16.mxu0 0
    %690 = vmatpush2.bf16.msra.mxu0 0
    %691 = vmatprep.subr.bf16.mxu0 0
    %692 = vmatpush2.bf16.msra.mxu0 0
    %693 = vmatprep.subr.bf16.mxu0 %v523
    %694 = vmatpush2.bf16.msra.mxu0 %v522
    %695 = vmatprep.subr.bf16.mxu0 %v515
    %696 = vmatpush2.bf16.msra.mxu0 %v514
    %697 = vmatprep.subr.bf16.mxu0 %v507
    %698 = vmatpush2.bf16.msra.mxu0 %v506
    %699 = vmatprep.subr.bf16.mxu0 %v499
    %700 = vmatpush2.bf16.msra.mxu0 %v498
    %701 = vmatprep.mubr.bf16.mxu0 %v626
    %702 = vmatmul.mubr.bf16.gmra.mxu0 %v46
    %v703 = vpop.f32.mrf.mxu0
    %v704 = vadd.f32 0.0, %v703
    %v705 = vpop.f32.mrf.mxu0
    %v706 = vadd.f32 0.0, %v705
    %v707 = vpop.f32.mrf.mxu0
    %v708 = vpop.f32.mrf.mxu0
    %709 = vdwg.mxu0
    %710 = vmatprep.subr.bf16.mxu0 %v493
    %711 = vmatpush1.bf16.msra.mxu0 %v492
    %712 = vmatprep.subr.bf16.mxu0 %v485
    %713 = vmatpush1.bf16.msra.mxu0 %v484
    %714 = vmatprep.subr.bf16.mxu0 %v477
    %715 = vmatpush1.bf16.msra.mxu0 %v476
    %716 = vmatprep.subr.bf16.mxu0 %v469
    %717 = vmatpush1.bf16.msra.mxu0 %v468
    %718 = vmatprep.subr.bf16.mxu0 %v461
    %719 = vmatpush1.bf16.msra.mxu0 %v460
    %720 = vmatprep.subr.bf16.mxu0 %v453
    %721 = vmatpush1.bf16.msra.mxu0 %v452
    %722 = vmatprep.subr.bf16.mxu0 %v445
    %723 = vmatpush1.bf16.msra.mxu0 %v444
    %724 = vmatprep.subr.bf16.mxu0 %v437
    %725 = vmatpush1.bf16.msra.mxu0 %v436
    %726 = vmatprep.subr.bf16.mxu0 0
    %727 = vmatpush2.bf16.msra.mxu0 0
    %728 = vmatprep.subr.bf16.mxu0 0
    %729 = vmatpush2.bf16.msra.mxu0 0
    %730 = vmatprep.subr.bf16.mxu0 0
    %731 = vmatpush2.bf16.msra.mxu0 0
    %732 = vmatprep.subr.bf16.mxu0 0
    %733 = vmatpush2.bf16.msra.mxu0 0
    %734 = vmatprep.subr.bf16.mxu0 %v525
    %735 = vmatpush2.bf16.msra.mxu0 %v524
    %736 = vmatprep.subr.bf16.mxu0 %v517
    %737 = vmatpush2.bf16.msra.mxu0 %v516
    %738 = vmatprep.subr.bf16.mxu0 %v509
    %739 = vmatpush2.bf16.msra.mxu0 %v508
    %740 = vmatprep.subr.bf16.mxu0 %v501
    %741 = vmatpush2.bf16.msra.mxu0 %v500
    %742 = vmatprep.mubr.bf16.mxu0 %v626
    %743 = vmatmul.mubr.bf16.gmra.mxu0 %v46
    %v744 = vpop.f32.mrf.mxu0
    %v745 = vadd.f32 0.0, %v744
    %v746 = vpop.f32.mrf.mxu0
    %v747 = vadd.f32 0.0, %v746
    %v748 = vpop.f32.mrf.mxu0
    %v749 = vpop.f32.mrf.mxu0
    %750 = vdwg.mxu0
    %751 = vmatprep.subr.bf16.mxu0 %v495
    %752 = vmatpush1.bf16.msra.mxu0 %v494
    %753 = vmatprep.subr.bf16.mxu0 %v487
    %754 = vmatpush1.bf16.msra.mxu0 %v486
    %755 = vmatprep.subr.bf16.mxu0 %v479
    %756 = vmatpush1.bf16.msra.mxu0 %v478
    %757 = vmatprep.subr.bf16.mxu0 %v471
    %758 = vmatpush1.bf16.msra.mxu0 %v470
    %759 = vmatprep.subr.bf16.mxu0 %v463
    %760 = vmatpush1.bf16.msra.mxu0 %v462
    %761 = vmatprep.subr.bf16.mxu0 %v455
    %762 = vmatpush1.bf16.msra.mxu0 %v454
    %763 = vmatprep.subr.bf16.mxu0 %v447
    %764 = vmatpush1.bf16.msra.mxu0 %v446
    %765 = vmatprep.subr.bf16.mxu0 %v439
    %766 = vmatpush1.bf16.msra.mxu0 %v438
    %767 = vmatprep.subr.bf16.mxu0 0
    %768 = vmatpush2.bf16.msra.mxu0 0
    %769 = vmatprep.subr.bf16.mxu0 0
    %770 = vmatpush2.bf16.msra.mxu0 0
    %771 = vmatprep.subr.bf16.mxu0 0
    %772 = vmatpush2.bf16.msra.mxu0 0
    %773 = vmatprep.subr.bf16.mxu0 0
    %774 = vmatpush2.bf16.msra.mxu0 0
    %775 = vmatprep.subr.bf16.mxu0 %v527
    %776 = vmatpush2.bf16.msra.mxu0 %v526
    %777 = vmatprep.subr.bf16.mxu0 %v519
    %778 = vmatpush2.bf16.msra.mxu0 %v518
    %779 = vmatprep.subr.bf16.mxu0 %v511
    %780 = vmatpush2.bf16.msra.mxu0 %v510
    %781 = vmatprep.subr.bf16.mxu0 %v503
    %782 = vmatpush2.bf16.msra.mxu0 %v502
    %783 = vmatprep.mubr.bf16.mxu0 %v626
    %784 = vmatmul.mubr.bf16.gmra.mxu0 %v46
    %v785 = vpop.f32.mrf.mxu0
    %v786 = vadd.f32 0.0, %v785
    %v787 = vpop.f32.mrf.mxu0
    %v788 = vadd.f32 0.0, %v787
    %v789 = vpop.f32.mrf.mxu0
    %v790 = vpop.f32.mrf.mxu0
    %791 = vdwg.mxu0
    %v792 = vld [vmem:[%s2] sm:$0xff]
    %v794 = vlaneseq
    %v795 = vshrl.u32 %v794, 7
    %v796 = vsub.s32 0, %v795
    %v797 = vrot.slane %v792, %v796
    %v798 = vlaneseq
    %v799 = vshrl.u32 %v798, 7
    %v800 = vsub.s32 1, %v799
    %v801 = vrot.slane %v792, %v800
    %v802 = vlaneseq
    %v803 = vshrl.u32 %v802, 7
    %v804 = vsub.s32 2, %v803
    %v805 = vrot.slane %v792, %v804
    %v806 = vlaneseq
    %v807 = vshrl.u32 %v806, 7
    %v808 = vsub.s32 3, %v807
    %v809 = vrot.slane %v792, %v808
    %v810 = vlaneseq
    %v811 = vshrl.u32 %v810, 7
    %v812 = vsub.s32 4, %v811
    %v813 = vrot.slane %v792, %v812
    %v814 = vlaneseq
    %v815 = vshrl.u32 %v814, 7
    %v816 = vsub.s32 5, %v815
    %v817 = vrot.slane %v792, %v816
    %v818 = vlaneseq
    %v819 = vshrl.u32 %v818, 7
    %v820 = vsub.s32 6, %v819
    %v821 = vrot.slane %v792, %v820
    %v822 = vlaneseq
    %v823 = vshrl.u32 %v822, 7
    %v824 = vsub.s32 7, %v823
    %v825 = vrot.slane %v792, %v824
    %v834 = vmul.f32 %v663, %v797
    %v835 = vmul.f32 %v665, %v801
    %v836 = vmul.f32 %v704, %v805
    %v837 = vmul.f32 %v706, %v809
    %v838 = vmul.f32 %v745, %v813
    %v839 = vmul.f32 %v747, %v817
    %v840 = vmul.f32 %v786, %v821
    %v841 = vmul.f32 %v788, %v825
    %v842 = vld [vmem:[%s3] sm:$0xff]
    %v844 = vlaneseq
    %v845 = vshrl.u32 %v844, 7
    %v846 = vsub.s32 0, %v845
    %v847 = vrot.slane %v842, %v846
    %v848 = vlaneseq
    %v849 = vshrl.u32 %v848, 7
    %v850 = vsub.s32 1, %v849
    %v851 = vrot.slane %v842, %v850
    %v852 = vlaneseq
    %v853 = vshrl.u32 %v852, 7
    %v854 = vsub.s32 2, %v853
    %v855 = vrot.slane %v842, %v854
    %v856 = vlaneseq
    %v857 = vshrl.u32 %v856, 7
    %v858 = vsub.s32 3, %v857
    %v859 = vrot.slane %v842, %v858
    %v860 = vlaneseq
    %v861 = vshrl.u32 %v860, 7
    %v862 = vsub.s32 4, %v861
    %v863 = vrot.slane %v842, %v862
    %v864 = vlaneseq
    %v865 = vshrl.u32 %v864, 7
    %v866 = vsub.s32 5, %v865
    %v867 = vrot.slane %v842, %v866
    %v868 = vlaneseq
    %v869 = vshrl.u32 %v868, 7
    %v870 = vsub.s32 6, %v869
    %v871 = vrot.slane %v842, %v870
    %v872 = vlaneseq
    %v873 = vshrl.u32 %v872, 7
    %v874 = vsub.s32 7, %v873
    %v875 = vrot.slane %v842, %v874
    %v884 = vadd.f32 %v834, %v847
    %v885 = vadd.f32 %v835, %v851
    %v886 = vadd.f32 %v836, %v855
    %v887 = vadd.f32 %v837, %v859
    %v888 = vadd.f32 %v838, %v863
    %v889 = vadd.f32 %v839, %v867
    %v890 = vadd.f32 %v840, %v871
    %v891 = vadd.f32 %v841, %v875
    %v892 = vmax.f32 %v884, 0.0
    %v893 = vmax.f32 %v885, 0.0
    %v894 = vmax.f32 %v886, 0.0
    %v895 = vmax.f32 %v887, 0.0
    %v896 = vmax.f32 %v888, 0.0
    %v897 = vmax.f32 %v889, 0.0
    %v898 = vmax.f32 %v890, 0.0
    %v899 = vmax.f32 %v891, 0.0
    %v900 = vpack.c.bf16 %v892, %v892
    %v901 = vpack.c.bf16 %v893, %v893
    %v902 = vpack.c.bf16 %v894, %v894
    %v903 = vpack.c.bf16 %v895, %v895
    %v904 = vpack.c.bf16 %v896, %v896
    %v905 = vpack.c.bf16 %v897, %v897
    %v906 = vpack.c.bf16 %v898, %v898
    %v907 = vpack.c.bf16 %v899, %v899
    %v908 = vld [vmem:[%s4] sm:$0xff]
    %v909 = vld [vmem:[%s4 + $0x8] sm:$0xff]
    %v910 = vld [vmem:[%s4 + $0x10] sm:$0xff]
    %v911 = vld [vmem:[%s4 + $0x18] sm:$0xff]
    %v912 = vld [vmem:[%s4 + $0x20] sm:$0xff]
    %v913 = vld [vmem:[%s4 + $0x28] sm:$0xff]
    %v914 = vld [vmem:[%s4 + $0x30] sm:$0xff]
    %v915 = vld [vmem:[%s4 + $0x38] sm:$0xff]
    %v916 = vld [vmem:[%s4 + $0x40] sm:$0xff]
    %v917 = vld [vmem:[%s4 + $0x48] sm:$0xff]
    %v918 = vld [vmem:[%s4 + $0x50] sm:$0xff]
    %v919 = vld [vmem:[%s4 + $0x58] sm:$0xff]
    %v920 = vld [vmem:[%s4 + $0x60] sm:$0xff]
    %v921 = vld [vmem:[%s4 + $0x68] sm:$0xff]
    %v922 = vld [vmem:[%s4 + $0x70] sm:$0xff]
    %v923 = vld [vmem:[%s4 + $0x78] sm:$0xff]
    %v924 = vld [vmem:[%s4 + $0x80] sm:$0xff]
    %v925 = vld [vmem:[%s4 + $0x88] sm:$0xff]
    %v926 = vld [vmem:[%s4 + $0x90] sm:$0xff]
    %v927 = vld [vmem:[%s4 + $0x98] sm:$0xff]
    %v928 = vld [vmem:[%s4 + $0xa0] sm:$0xff]
    %v929 = vld [vmem:[%s4 + $0xa8] sm:$0xff]
    %v930 = vld [vmem:[%s4 + $0xb0] sm:$0xff]
    %v931 = vld [vmem:[%s4 + $0xb8] sm:$0xff]
    %v932 = vld [vmem:[%s4 + $0xc0] sm:$0xff]
    %v933 = vld [vmem:[%s4 + $0xc8] sm:$0xff]
    %v934 = vld [vmem:[%s4 + $0xd0] sm:$0xff]
    %v935 = vld [vmem:[%s4 + $0xd8] sm:$0xff]
    %v936 = vld [vmem:[%s4 + $0xe0] sm:$0xff]
    %v937 = vld [vmem:[%s4 + $0xe8] sm:$0xff]
    %v938 = vld [vmem:[%s4 + $0xf0] sm:$0xff]
    %v939 = vld [vmem:[%s4 + $0xf8] sm:$0xff]
    %v940 = vld [vmem:[%s4 + $0x100] sm:$0xff]
    %v941 = vld [vmem:[%s4 + $0x108] sm:$0xff]
    %v942 = vld [vmem:[%s4 + $0x110] sm:$0xff]
    %v943 = vld [vmem:[%s4 + $0x118] sm:$0xff]
    %v944 = vld [vmem:[%s4 + $0x120] sm:$0xff]
    %v945 = vld [vmem:[%s4 + $0x128] sm:$0xff]
    %v946 = vld [vmem:[%s4 + $0x130] sm:$0xff]
    %v947 = vld [vmem:[%s4 + $0x138] sm:$0xff]
    %v948 = vld [vmem:[%s4 + $0x140] sm:$0xff]
    %v949 = vld [vmem:[%s4 + $0x148] sm:$0xff]
    %v950 = vld [vmem:[%s4 + $0x150] sm:$0xff]
    %v951 = vld [vmem:[%s4 + $0x158] sm:$0xff]
    %v952 = vld [vmem:[%s4 + $0x160] sm:$0xff]
    %v953 = vld [vmem:[%s4 + $0x168] sm:$0xff]
    %v954 = vld [vmem:[%s4 + $0x170] sm:$0xff]
    %v955 = vld [vmem:[%s4 + $0x178] sm:$0xff]
    %v956 = vld [vmem:[%s4 + $0x180] sm:$0xff]
    %v957 = vld [vmem:[%s4 + $0x188] sm:$0xff]
    %v958 = vld [vmem:[%s4 + $0x190] sm:$0xff]
    %v959 = vld [vmem:[%s4 + $0x198] sm:$0xff]
    %v960 = vld [vmem:[%s4 + $0x1a0] sm:$0xff]
    %v961 = vld [vmem:[%s4 + $0x1a8] sm:$0xff]
    %v962 = vld [vmem:[%s4 + $0x1b0] sm:$0xff]
    %v963 = vld [vmem:[%s4 + $0x1b8] sm:$0xff]
    %v964 = vld [vmem:[%s4 + $0x1c0] sm:$0xff]
    %v965 = vld [vmem:[%s4 + $0x1c8] sm:$0xff]
    %v966 = vld [vmem:[%s4 + $0x1d0] sm:$0xff]
    %v967 = vld [vmem:[%s4 + $0x1d8] sm:$0xff]
    %v968 = vld [vmem:[%s4 + $0x1e0] sm:$0xff]
    %v969 = vld [vmem:[%s4 + $0x1e8] sm:$0xff]
    %v970 = vld [vmem:[%s4 + $0x1f0] sm:$0xff]
    %v971 = vld [vmem:[%s4 + $0x1f8] sm:$0xff]
    %v972 = vld [vmem:[%s4 + $0x200] sm:$0xff]
    %v973 = vld [vmem:[%s4 + $0x208] sm:$0xff]
    %v974 = vld [vmem:[%s4 + $0x210] sm:$0xff]
    %v975 = vld [vmem:[%s4 + $0x218] sm:$0xff]
    %v976 = vld [vmem:[%s4 + $0x220] sm:$0xff]
    %v977 = vld [vmem:[%s4 + $0x228] sm:$0xff]
    %v978 = vld [vmem:[%s4 + $0x230] sm:$0xff]
    %v979 = vld [vmem:[%s4 + $0x238] sm:$0xff]
    %v980 = vld [vmem:[%s4 + $0x240] sm:$0xff]
    %v981 = vld [vmem:[%s4 + $0x248] sm:$0xff]
    %v982 = vld [vmem:[%s4 + $0x250] sm:$0xff]
    %v983 = vld [vmem:[%s4 + $0x258] sm:$0xff]
    %v984 = vld [vmem:[%s4 + $0x260] sm:$0xff]
    %v985 = vld [vmem:[%s4 + $0x268] sm:$0xff]
    %v986 = vld [vmem:[%s4 + $0x270] sm:$0xff]
    %v987 = vld [vmem:[%s4 + $0x278] sm:$0xff]
    %v988 = vld [vmem:[%s4 + $0x280] sm:$0xff]
    %v989 = vld [vmem:[%s4 + $0x288] sm:$0xff]
    %v990 = vld [vmem:[%s4 + $0x290] sm:$0xff]
    %v991 = vld [vmem:[%s4 + $0x298] sm:$0xff]
    %v992 = vld [vmem:[%s4 + $0x2a0] sm:$0xff]
    %v993 = vld [vmem:[%s4 + $0x2a8] sm:$0xff]
    %v994 = vld [vmem:[%s4 + $0x2b0] sm:$0xff]
    %v995 = vld [vmem:[%s4 + $0x2b8] sm:$0xff]
    %v996 = vld [vmem:[%s4 + $0x2c0] sm:$0xff]
    %v997 = vld [vmem:[%s4 + $0x2c8] sm:$0xff]
    %v998 = vld [vmem:[%s4 + $0x2d0] sm:$0xff]
    %v999 = vld [vmem:[%s4 + $0x2d8] sm:$0xff]
    %v1000 = vld [vmem:[%s4 + $0x2e0] sm:$0xff]
    %v1001 = vld [vmem:[%s4 + $0x2e8] sm:$0xff]
    %v1002 = vld [vmem:[%s4 + $0x2f0] sm:$0xff]
    %v1003 = vld [vmem:[%s4 + $0x2f8] sm:$0xff]
    %v1004 = vld [vmem:[%s4 + $0x300] sm:$0xff]
    %v1005 = vld [vmem:[%s4 + $0x308] sm:$0xff]
    %v1006 = vld [vmem:[%s4 + $0x310] sm:$0xff]
    %v1007 = vld [vmem:[%s4 + $0x318] sm:$0xff]
    %v1008 = vld [vmem:[%s4 + $0x320] sm:$0xff]
    %v1009 = vld [vmem:[%s4 + $0x328] sm:$0xff]
    %v1010 = vld [vmem:[%s4 + $0x330] sm:$0xff]
    %v1011 = vld [vmem:[%s4 + $0x338] sm:$0xff]
    %v1012 = vld [vmem:[%s4 + $0x340] sm:$0xff]
    %v1013 = vld [vmem:[%s4 + $0x348] sm:$0xff]
    %v1014 = vld [vmem:[%s4 + $0x350] sm:$0xff]
    %v1015 = vld [vmem:[%s4 + $0x358] sm:$0xff]
    %v1016 = vld [vmem:[%s4 + $0x360] sm:$0xff]
    %v1017 = vld [vmem:[%s4 + $0x368] sm:$0xff]
    %v1018 = vld [vmem:[%s4 + $0x370] sm:$0xff]
    %v1019 = vld [vmem:[%s4 + $0x378] sm:$0xff]
    %v1020 = vld [vmem:[%s4 + $0x380] sm:$0xff]
    %v1021 = vld [vmem:[%s4 + $0x388] sm:$0xff]
    %v1022 = vld [vmem:[%s4 + $0x390] sm:$0xff]
    %v1023 = vld [vmem:[%s4 + $0x398] sm:$0xff]
    %v1024 = vld [vmem:[%s4 + $0x3a0] sm:$0xff]
    %v1025 = vld [vmem:[%s4 + $0x3a8] sm:$0xff]
    %v1026 = vld [vmem:[%s4 + $0x3b0] sm:$0xff]
    %v1027 = vld [vmem:[%s4 + $0x3b8] sm:$0xff]
    %v1028 = vld [vmem:[%s4 + $0x3c0] sm:$0xff]
    %v1029 = vld [vmem:[%s4 + $0x3c8] sm:$0xff]
    %v1030 = vld [vmem:[%s4 + $0x3d0] sm:$0xff]
    %v1031 = vld [vmem:[%s4 + $0x3d8] sm:$0xff]
    %v1032 = vld [vmem:[%s4 + $0x3e0] sm:$0xff]
    %v1033 = vld [vmem:[%s4 + $0x3e8] sm:$0xff]
    %v1034 = vld [vmem:[%s4 + $0x3f0] sm:$0xff]
    %v1035 = vld [vmem:[%s4 + $0x3f8] sm:$0xff]
    %v1036 = vld [vmem:[%s4 + $0x400] sm:$0xff]
    %v1037 = vld [vmem:[%s4 + $0x408] sm:$0xff]
    %v1038 = vld [vmem:[%s4 + $0x410] sm:$0xff]
    %v1039 = vld [vmem:[%s4 + $0x418] sm:$0xff]
    %v1040 = vld [vmem:[%s4 + $0x420] sm:$0xff]
    %v1041 = vld [vmem:[%s4 + $0x428] sm:$0xff]
    %v1042 = vld [vmem:[%s4 + $0x430] sm:$0xff]
    %v1043 = vld [vmem:[%s4 + $0x438] sm:$0xff]
    %v1044 = vld [vmem:[%s4 + $0x440] sm:$0xff]
    %v1045 = vld [vmem:[%s4 + $0x448] sm:$0xff]
    %v1046 = vld [vmem:[%s4 + $0x450] sm:$0xff]
    %v1047 = vld [vmem:[%s4 + $0x458] sm:$0xff]
    %v1048 = vld [vmem:[%s4 + $0x460] sm:$0xff]
    %v1049 = vld [vmem:[%s4 + $0x468] sm:$0xff]
    %v1050 = vld [vmem:[%s4 + $0x470] sm:$0xff]
    %v1051 = vld [vmem:[%s4 + $0x478] sm:$0xff]
    %v1052 = vld [vmem:[%s4 + $0x480] sm:$0xff]
    %v1053 = vld [vmem:[%s4 + $0x488] sm:$0xff]
    %v1054 = vld [vmem:[%s4 + $0x490] sm:$0xff]
    %v1055 = vld [vmem:[%s4 + $0x498] sm:$0xff]
    %v1056 = vld [vmem:[%s4 + $0x4a0] sm:$0xff]
    %v1057 = vld [vmem:[%s4 + $0x4a8] sm:$0xff]
    %v1058 = vld [vmem:[%s4 + $0x4b0] sm:$0xff]
    %v1059 = vld [vmem:[%s4 + $0x4b8] sm:$0xff]
    %v1060 = vld [vmem:[%s4 + $0x4c0] sm:$0xff]
    %v1061 = vld [vmem:[%s4 + $0x4c8] sm:$0xff]
    %v1062 = vld [vmem:[%s4 + $0x4d0] sm:$0xff]
    %v1063 = vld [vmem:[%s4 + $0x4d8] sm:$0xff]
    %v1064 = vld [vmem:[%s4 + $0x4e0] sm:$0xff]
    %v1065 = vld [vmem:[%s4 + $0x4e8] sm:$0xff]
    %v1066 = vld [vmem:[%s4 + $0x4f0] sm:$0xff]
    %v1067 = vld [vmem:[%s4 + $0x4f8] sm:$0xff]
    %v1068 = vld [vmem:[%s4 + $0x500] sm:$0xff]
    %v1069 = vld [vmem:[%s4 + $0x508] sm:$0xff]
    %v1070 = vld [vmem:[%s4 + $0x510] sm:$0xff]
    %v1071 = vld [vmem:[%s4 + $0x518] sm:$0xff]
    %v1072 = vld [vmem:[%s4 + $0x520] sm:$0xff]
    %v1073 = vld [vmem:[%s4 + $0x528] sm:$0xff]
    %v1074 = vld [vmem:[%s4 + $0x530] sm:$0xff]
    %v1075 = vld [vmem:[%s4 + $0x538] sm:$0xff]
    %v1076 = vld [vmem:[%s4 + $0x540] sm:$0xff]
    %v1077 = vld [vmem:[%s4 + $0x548] sm:$0xff]
    %v1078 = vld [vmem:[%s4 + $0x550] sm:$0xff]
    %v1079 = vld [vmem:[%s4 + $0x558] sm:$0xff]
    %v1080 = vld [vmem:[%s4 + $0x560] sm:$0xff]
    %v1081 = vld [vmem:[%s4 + $0x568] sm:$0xff]
    %v1082 = vld [vmem:[%s4 + $0x570] sm:$0xff]
    %v1083 = vld [vmem:[%s4 + $0x578] sm:$0xff]
    %v1084 = vld [vmem:[%s4 + $0x580] sm:$0xff]
    %v1085 = vld [vmem:[%s4 + $0x588] sm:$0xff]
    %v1086 = vld [vmem:[%s4 + $0x590] sm:$0xff]
    %v1087 = vld [vmem:[%s4 + $0x598] sm:$0xff]
    %v1088 = vld [vmem:[%s4 + $0x5a0] sm:$0xff]
    %v1089 = vld [vmem:[%s4 + $0x5a8] sm:$0xff]
    %v1090 = vld [vmem:[%s4 + $0x5b0] sm:$0xff]
    %v1091 = vld [vmem:[%s4 + $0x5b8] sm:$0xff]
    %v1092 = vld [vmem:[%s4 + $0x5c0] sm:$0xff]
    %v1093 = vld [vmem:[%s4 + $0x5c8] sm:$0xff]
    %v1094 = vld [vmem:[%s4 + $0x5d0] sm:$0xff]
    %v1095 = vld [vmem:[%s4 + $0x5d8] sm:$0xff]
    %v1096 = vld [vmem:[%s4 + $0x5e0] sm:$0xff]
    %v1097 = vld [vmem:[%s4 + $0x5e8] sm:$0xff]
    %v1098 = vld [vmem:[%s4 + $0x5f0] sm:$0xff]
    %v1099 = vld [vmem:[%s4 + $0x5f8] sm:$0xff]
    %v1100 = vld [vmem:[%s4 + $0x600] sm:$0xff]
    %v1101 = vld [vmem:[%s4 + $0x608] sm:$0xff]
    %v1102 = vld [vmem:[%s4 + $0x610] sm:$0xff]
    %v1103 = vld [vmem:[%s4 + $0x618] sm:$0xff]
    %v1104 = vld [vmem:[%s4 + $0x620] sm:$0xff]
    %v1105 = vld [vmem:[%s4 + $0x628] sm:$0xff]
    %v1106 = vld [vmem:[%s4 + $0x630] sm:$0xff]
    %v1107 = vld [vmem:[%s4 + $0x638] sm:$0xff]
    %v1108 = vld [vmem:[%s4 + $0x640] sm:$0xff]
    %v1109 = vld [vmem:[%s4 + $0x648] sm:$0xff]
    %v1110 = vld [vmem:[%s4 + $0x650] sm:$0xff]
    %v1111 = vld [vmem:[%s4 + $0x658] sm:$0xff]
    %v1112 = vld [vmem:[%s4 + $0x660] sm:$0xff]
    %v1113 = vld [vmem:[%s4 + $0x668] sm:$0xff]
    %v1114 = vld [vmem:[%s4 + $0x670] sm:$0xff]
    %v1115 = vld [vmem:[%s4 + $0x678] sm:$0xff]
    %v1116 = vld [vmem:[%s4 + $0x680] sm:$0xff]
    %v1117 = vld [vmem:[%s4 + $0x688] sm:$0xff]
    %v1118 = vld [vmem:[%s4 + $0x690] sm:$0xff]
    %v1119 = vld [vmem:[%s4 + $0x698] sm:$0xff]
    %v1120 = vld [vmem:[%s4 + $0x6a0] sm:$0xff]
    %v1121 = vld [vmem:[%s4 + $0x6a8] sm:$0xff]
    %v1122 = vld [vmem:[%s4 + $0x6b0] sm:$0xff]
    %v1123 = vld [vmem:[%s4 + $0x6b8] sm:$0xff]
    %v1124 = vld [vmem:[%s4 + $0x6c0] sm:$0xff]
    %v1125 = vld [vmem:[%s4 + $0x6c8] sm:$0xff]
    %v1126 = vld [vmem:[%s4 + $0x6d0] sm:$0xff]
    %v1127 = vld [vmem:[%s4 + $0x6d8] sm:$0xff]
    %v1128 = vld [vmem:[%s4 + $0x6e0] sm:$0xff]
    %v1129 = vld [vmem:[%s4 + $0x6e8] sm:$0xff]
    %v1130 = vld [vmem:[%s4 + $0x6f0] sm:$0xff]
    %v1131 = vld [vmem:[%s4 + $0x6f8] sm:$0xff]
    %v1132 = vld [vmem:[%s4 + $0x700] sm:$0xff]
    %v1133 = vld [vmem:[%s4 + $0x708] sm:$0xff]
    %v1134 = vld [vmem:[%s4 + $0x710] sm:$0xff]
    %v1135 = vld [vmem:[%s4 + $0x718] sm:$0xff]
    %v1136 = vld [vmem:[%s4 + $0x720] sm:$0xff]
    %v1137 = vld [vmem:[%s4 + $0x728] sm:$0xff]
    %v1138 = vld [vmem:[%s4 + $0x730] sm:$0xff]
    %v1139 = vld [vmem:[%s4 + $0x738] sm:$0xff]
    %v1140 = vld [vmem:[%s4 + $0x740] sm:$0xff]
    %v1141 = vld [vmem:[%s4 + $0x748] sm:$0xff]
    %v1142 = vld [vmem:[%s4 + $0x750] sm:$0xff]
    %v1143 = vld [vmem:[%s4 + $0x758] sm:$0xff]
    %v1144 = vld [vmem:[%s4 + $0x760] sm:$0xff]
    %v1145 = vld [vmem:[%s4 + $0x768] sm:$0xff]
    %v1146 = vld [vmem:[%s4 + $0x770] sm:$0xff]
    %v1147 = vld [vmem:[%s4 + $0x778] sm:$0xff]
    %v1148 = vld [vmem:[%s4 + $0x780] sm:$0xff]
    %v1149 = vld [vmem:[%s4 + $0x788] sm:$0xff]
    %v1150 = vld [vmem:[%s4 + $0x790] sm:$0xff]
    %v1151 = vld [vmem:[%s4 + $0x798] sm:$0xff]
    %v1152 = vld [vmem:[%s4 + $0x7a0] sm:$0xff]
    %v1153 = vld [vmem:[%s4 + $0x7a8] sm:$0xff]
    %v1154 = vld [vmem:[%s4 + $0x7b0] sm:$0xff]
    %v1155 = vld [vmem:[%s4 + $0x7b8] sm:$0xff]
    %v1156 = vld [vmem:[%s4 + $0x7c0] sm:$0xff]
    %v1157 = vld [vmem:[%s4 + $0x7c8] sm:$0xff]
    %v1158 = vld [vmem:[%s4 + $0x7d0] sm:$0xff]
    %v1159 = vld [vmem:[%s4 + $0x7d8] sm:$0xff]
    %v1160 = vld [vmem:[%s4 + $0x7e0] sm:$0xff]
    %v1161 = vld [vmem:[%s4 + $0x7e8] sm:$0xff]
    %v1162 = vld [vmem:[%s4 + $0x7f0] sm:$0xff]
    %v1163 = vld [vmem:[%s4 + $0x7f8] sm:$0xff]
    %v1420 = vunpack.c.l.b16 %v908
    %v1421 = vunpack.c.h.b16 %v908
    %v1422 = vunpack.c.l.b16 %v909
    %v1423 = vunpack.c.h.b16 %v909
    %v1424 = vunpack.c.l.b16 %v910
    %v1425 = vunpack.c.h.b16 %v910
    %v1426 = vunpack.c.l.b16 %v911
    %v1427 = vunpack.c.h.b16 %v911
    %v1428 = vunpack.c.l.b16 %v912
    %v1429 = vunpack.c.h.b16 %v912
    %v1430 = vunpack.c.l.b16 %v913
    %v1431 = vunpack.c.h.b16 %v913
    %v1432 = vunpack.c.l.b16 %v914
    %v1433 = vunpack.c.h.b16 %v914
    %v1434 = vunpack.c.l.b16 %v915
    %v1435 = vunpack.c.h.b16 %v915
    %v1436 = vunpack.c.l.b16 %v916
    %v1437 = vunpack.c.h.b16 %v916
    %v1438 = vunpack.c.l.b16 %v917
    %v1439 = vunpack.c.h.b16 %v917
    %v1440 = vunpack.c.l.b16 %v918
    %v1441 = vunpack.c.h.b16 %v918
    %v1442 = vunpack.c.l.b16 %v919
    %v1443 = vunpack.c.h.b16 %v919
    %v1444 = vunpack.c.l.b16 %v920
    %v1445 = vunpack.c.h.b16 %v920
    %v1446 = vunpack.c.l.b16 %v921
    %v1447 = vunpack.c.h.b16 %v921
    %v1448 = vunpack.c.l.b16 %v922
    %v1449 = vunpack.c.h.b16 %v922
    %v1450 = vunpack.c.l.b16 %v923
    %v1451 = vunpack.c.h.b16 %v923
    %v1452 = vunpack.c.l.b16 %v924
    %v1453 = vunpack.c.h.b16 %v924
    %v1454 = vunpack.c.l.b16 %v925
    %v1455 = vunpack.c.h.b16 %v925
    %v1456 = vunpack.c.l.b16 %v926
    %v1457 = vunpack.c.h.b16 %v926
    %v1458 = vunpack.c.l.b16 %v927
    %v1459 = vunpack.c.h.b16 %v927
    %v1460 = vunpack.c.l.b16 %v928
    %v1461 = vunpack.c.h.b16 %v928
    %v1462 = vunpack.c.l.b16 %v929
    %v1463 = vunpack.c.h.b16 %v929
    %v1464 = vunpack.c.l.b16 %v930
    %v1465 = vunpack.c.h.b16 %v930
    %v1466 = vunpack.c.l.b16 %v931
    %v1467 = vunpack.c.h.b16 %v931
    %v1468 = vunpack.c.l.b16 %v932
    %v1469 = vunpack.c.h.b16 %v932
    %v1470 = vunpack.c.l.b16 %v933
    %v1471 = vunpack.c.h.b16 %v933
    %v1472 = vunpack.c.l.b16 %v934
    %v1473 = vunpack.c.h.b16 %v934
    %v1474 = vunpack.c.l.b16 %v935
    %v1475 = vunpack.c.h.b16 %v935
    %v1476 = vunpack.c.l.b16 %v936
    %v1477 = vunpack.c.h.b16 %v936
    %v1478 = vunpack.c.l.b16 %v937
    %v1479 = vunpack.c.h.b16 %v937
    %v1480 = vunpack.c.l.b16 %v938
    %v1481 = vunpack.c.h.b16 %v938
    %v1482 = vunpack.c.l.b16 %v939
    %v1483 = vunpack.c.h.b16 %v939
    %v1484 = vunpack.c.l.b16 %v940
    %v1485 = vunpack.c.h.b16 %v940
    %v1486 = vunpack.c.l.b16 %v941
    %v1487 = vunpack.c.h.b16 %v941
    %v1488 = vunpack.c.l.b16 %v942
    %v1489 = vunpack.c.h.b16 %v942
    %v1490 = vunpack.c.l.b16 %v943
    %v1491 = vunpack.c.h.b16 %v943
    %v1492 = vunpack.c.l.b16 %v944
    %v1493 = vunpack.c.h.b16 %v944
    %v1494 = vunpack.c.l.b16 %v945
    %v1495 = vunpack.c.h.b16 %v945
    %v1496 = vunpack.c.l.b16 %v946
    %v1497 = vunpack.c.h.b16 %v946
    %v1498 = vunpack.c.l.b16 %v947
    %v1499 = vunpack.c.h.b16 %v947
    %v1500 = vunpack.c.l.b16 %v948
    %v1501 = vunpack.c.h.b16 %v948
    %v1502 = vunpack.c.l.b16 %v949
    %v1503 = vunpack.c.h.b16 %v949
    %v1504 = vunpack.c.l.b16 %v950
    %v1505 = vunpack.c.h.b16 %v950
    %v1506 = vunpack.c.l.b16 %v951
    %v1507 = vunpack.c.h.b16 %v951
    %v1508 = vunpack.c.l.b16 %v952
    %v1509 = vunpack.c.h.b16 %v952
    %v1510 = vunpack.c.l.b16 %v953
    %v1511 = vunpack.c.h.b16 %v953
    %v1512 = vunpack.c.l.b16 %v954
    %v1513 = vunpack.c.h.b16 %v954
    %v1514 = vunpack.c.l.b16 %v955
    %v1515 = vunpack.c.h.b16 %v955
    %v1516 = vunpack.c.l.b16 %v956
    %v1517 = vunpack.c.h.b16 %v956
    %v1518 = vunpack.c.l.b16 %v957
    %v1519 = vunpack.c.h.b16 %v957
    %v1520 = vunpack.c.l.b16 %v958
    %v1521 = vunpack.c.h.b16 %v958
    %v1522 = vunpack.c.l.b16 %v959
    %v1523 = vunpack.c.h.b16 %v959
    %v1524 = vunpack.c.l.b16 %v960
    %v1525 = vunpack.c.h.b16 %v960
    %v1526 = vunpack.c.l.b16 %v961
    %v1527 = vunpack.c.h.b16 %v961
    %v1528 = vunpack.c.l.b16 %v962
    %v1529 = vunpack.c.h.b16 %v962
    %v1530 = vunpack.c.l.b16 %v963
    %v1531 = vunpack.c.h.b16 %v963
    %v1532 = vunpack.c.l.b16 %v964
    %v1533 = vunpack.c.h.b16 %v964
    %v1534 = vunpack.c.l.b16 %v965
    %v1535 = vunpack.c.h.b16 %v965
    %v1536 = vunpack.c.l.b16 %v966
    %v1537 = vunpack.c.h.b16 %v966
    %v1538 = vunpack.c.l.b16 %v967
    %v1539 = vunpack.c.h.b16 %v967
    %v1540 = vunpack.c.l.b16 %v968
    %v1541 = vunpack.c.h.b16 %v968
    %v1542 = vunpack.c.l.b16 %v969
    %v1543 = vunpack.c.h.b16 %v969
    %v1544 = vunpack.c.l.b16 %v970
    %v1545 = vunpack.c.h.b16 %v970
    %v1546 = vunpack.c.l.b16 %v971
    %v1547 = vunpack.c.h.b16 %v971
    %v1548 = vunpack.c.l.b16 %v972
    %v1549 = vunpack.c.h.b16 %v972
    %v1550 = vunpack.c.l.b16 %v973
    %v1551 = vunpack.c.h.b16 %v973
    %v1552 = vunpack.c.l.b16 %v974
    %v1553 = vunpack.c.h.b16 %v974
    %v1554 = vunpack.c.l.b16 %v975
    %v1555 = vunpack.c.h.b16 %v975
    %v1556 = vunpack.c.l.b16 %v976
    %v1557 = vunpack.c.h.b16 %v976
    %v1558 = vunpack.c.l.b16 %v977
    %v1559 = vunpack.c.h.b16 %v977
    %v1560 = vunpack.c.l.b16 %v978
    %v1561 = vunpack.c.h.b16 %v978
    %v1562 = vunpack.c.l.b16 %v979
    %v1563 = vunpack.c.h.b16 %v979
    %v1564 = vunpack.c.l.b16 %v980
    %v1565 = vunpack.c.h.b16 %v980
    %v1566 = vunpack.c.l.b16 %v981
    %v1567 = vunpack.c.h.b16 %v981
    %v1568 = vunpack.c.l.b16 %v982
    %v1569 = vunpack.c.h.b16 %v982
    %v1570 = vunpack.c.l.b16 %v983
    %v1571 = vunpack.c.h.b16 %v983
    %v1572 = vunpack.c.l.b16 %v984
    %v1573 = vunpack.c.h.b16 %v984
    %v1574 = vunpack.c.l.b16 %v985
    %v1575 = vunpack.c.h.b16 %v985
    %v1576 = vunpack.c.l.b16 %v986
    %v1577 = vunpack.c.h.b16 %v986
    %v1578 = vunpack.c.l.b16 %v987
    %v1579 = vunpack.c.h.b16 %v987
    %v1580 = vunpack.c.l.b16 %v988
    %v1581 = vunpack.c.h.b16 %v988
    %v1582 = vunpack.c.l.b16 %v989
    %v1583 = vunpack.c.h.b16 %v989
    %v1584 = vunpack.c.l.b16 %v990
    %v1585 = vunpack.c.h.b16 %v990
    %v1586 = vunpack.c.l.b16 %v991
    %v1587 = vunpack.c.h.b16 %v991
    %v1588 = vunpack.c.l.b16 %v992
    %v1589 = vunpack.c.h.b16 %v992
    %v1590 = vunpack.c.l.b16 %v993
    %v1591 = vunpack.c.h.b16 %v993
    %v1592 = vunpack.c.l.b16 %v994
    %v1593 = vunpack.c.h.b16 %v994
    %v1594 = vunpack.c.l.b16 %v995
    %v1595 = vunpack.c.h.b16 %v995
    %v1596 = vunpack.c.l.b16 %v996
    %v1597 = vunpack.c.h.b16 %v996
    %v1598 = vunpack.c.l.b16 %v997
    %v1599 = vunpack.c.h.b16 %v997
    %v1600 = vunpack.c.l.b16 %v998
    %v1601 = vunpack.c.h.b16 %v998
    %v1602 = vunpack.c.l.b16 %v999
    %v1603 = vunpack.c.h.b16 %v999
    %v1604 = vunpack.c.l.b16 %v1000
    %v1605 = vunpack.c.h.b16 %v1000
    %v1606 = vunpack.c.l.b16 %v1001
    %v1607 = vunpack.c.h.b16 %v1001
    %v1608 = vunpack.c.l.b16 %v1002
    %v1609 = vunpack.c.h.b16 %v1002
    %v1610 = vunpack.c.l.b16 %v1003
    %v1611 = vunpack.c.h.b16 %v1003
    %v1612 = vunpack.c.l.b16 %v1004
    %v1613 = vunpack.c.h.b16 %v1004
    %v1614 = vunpack.c.l.b16 %v1005
    %v1615 = vunpack.c.h.b16 %v1005
    %v1616 = vunpack.c.l.b16 %v1006
    %v1617 = vunpack.c.h.b16 %v1006
    %v1618 = vunpack.c.l.b16 %v1007
    %v1619 = vunpack.c.h.b16 %v1007
    %v1620 = vunpack.c.l.b16 %v1008
    %v1621 = vunpack.c.h.b16 %v1008
    %v1622 = vunpack.c.l.b16 %v1009
    %v1623 = vunpack.c.h.b16 %v1009
    %v1624 = vunpack.c.l.b16 %v1010
    %v1625 = vunpack.c.h.b16 %v1010
    %v1626 = vunpack.c.l.b16 %v1011
    %v1627 = vunpack.c.h.b16 %v1011
    %v1628 = vunpack.c.l.b16 %v1012
    %v1629 = vunpack.c.h.b16 %v1012
    %v1630 = vunpack.c.l.b16 %v1013
    %v1631 = vunpack.c.h.b16 %v1013
    %v1632 = vunpack.c.l.b16 %v1014
    %v1633 = vunpack.c.h.b16 %v1014
    %v1634 = vunpack.c.l.b16 %v1015
    %v1635 = vunpack.c.h.b16 %v1015
    %v1636 = vunpack.c.l.b16 %v1016
    %v1637 = vunpack.c.h.b16 %v1016
    %v1638 = vunpack.c.l.b16 %v1017
    %v1639 = vunpack.c.h.b16 %v1017
    %v1640 = vunpack.c.l.b16 %v1018
    %v1641 = vunpack.c.h.b16 %v1018
    %v1642 = vunpack.c.l.b16 %v1019
    %v1643 = vunpack.c.h.b16 %v1019
    %v1644 = vunpack.c.l.b16 %v1020
    %v1645 = vunpack.c.h.b16 %v1020
    %v1646 = vunpack.c.l.b16 %v1021
    %v1647 = vunpack.c.h.b16 %v1021
    %v1648 = vunpack.c.l.b16 %v1022
    %v1649 = vunpack.c.h.b16 %v1022
    %v1650 = vunpack.c.l.b16 %v1023
    %v1651 = vunpack.c.h.b16 %v1023
    %v1652 = vunpack.c.l.b16 %v1024
    %v1653 = vunpack.c.h.b16 %v1024
    %v1654 = vunpack.c.l.b16 %v1025
    %v1655 = vunpack.c.h.b16 %v1025
    %v1656 = vunpack.c.l.b16 %v1026
    %v1657 = vunpack.c.h.b16 %v1026
    %v1658 = vunpack.c.l.b16 %v1027
    %v1659 = vunpack.c.h.b16 %v1027
    %v1660 = vunpack.c.l.b16 %v1028
    %v1661 = vunpack.c.h.b16 %v1028
    %v1662 = vunpack.c.l.b16 %v1029
    %v1663 = vunpack.c.h.b16 %v1029
    %v1664 = vunpack.c.l.b16 %v1030
    %v1665 = vunpack.c.h.b16 %v1030
    %v1666 = vunpack.c.l.b16 %v1031
    %v1667 = vunpack.c.h.b16 %v1031
    %v1668 = vunpack.c.l.b16 %v1032
    %v1669 = vunpack.c.h.b16 %v1032
    %v1670 = vunpack.c.l.b16 %v1033
    %v1671 = vunpack.c.h.b16 %v1033
    %v1672 = vunpack.c.l.b16 %v1034
    %v1673 = vunpack.c.h.b16 %v1034
    %v1674 = vunpack.c.l.b16 %v1035
    %v1675 = vunpack.c.h.b16 %v1035
    %v1676 = vunpack.c.l.b16 %v1036
    %v1677 = vunpack.c.h.b16 %v1036
    %v1678 = vunpack.c.l.b16 %v1037
    %v1679 = vunpack.c.h.b16 %v1037
    %v1680 = vunpack.c.l.b16 %v1038
    %v1681 = vunpack.c.h.b16 %v1038
    %v1682 = vunpack.c.l.b16 %v1039
    %v1683 = vunpack.c.h.b16 %v1039
    %v1684 = vunpack.c.l.b16 %v1040
    %v1685 = vunpack.c.h.b16 %v1040
    %v1686 = vunpack.c.l.b16 %v1041
    %v1687 = vunpack.c.h.b16 %v1041
    %v1688 = vunpack.c.l.b16 %v1042
    %v1689 = vunpack.c.h.b16 %v1042
    %v1690 = vunpack.c.l.b16 %v1043
    %v1691 = vunpack.c.h.b16 %v1043
    %v1692 = vunpack.c.l.b16 %v1044
    %v1693 = vunpack.c.h.b16 %v1044
    %v1694 = vunpack.c.l.b16 %v1045
    %v1695 = vunpack.c.h.b16 %v1045
    %v1696 = vunpack.c.l.b16 %v1046
    %v1697 = vunpack.c.h.b16 %v1046
    %v1698 = vunpack.c.l.b16 %v1047
    %v1699 = vunpack.c.h.b16 %v1047
    %v1700 = vunpack.c.l.b16 %v1048
    %v1701 = vunpack.c.h.b16 %v1048
    %v1702 = vunpack.c.l.b16 %v1049
    %v1703 = vunpack.c.h.b16 %v1049
    %v1704 = vunpack.c.l.b16 %v1050
    %v1705 = vunpack.c.h.b16 %v1050
    %v1706 = vunpack.c.l.b16 %v1051
    %v1707 = vunpack.c.h.b16 %v1051
    %v1708 = vunpack.c.l.b16 %v1052
    %v1709 = vunpack.c.h.b16 %v1052
    %v1710 = vunpack.c.l.b16 %v1053
    %v1711 = vunpack.c.h.b16 %v1053
    %v1712 = vunpack.c.l.b16 %v1054
    %v1713 = vunpack.c.h.b16 %v1054
    %v1714 = vunpack.c.l.b16 %v1055
    %v1715 = vunpack.c.h.b16 %v1055
    %v1716 = vunpack.c.l.b16 %v1056
    %v1717 = vunpack.c.h.b16 %v1056
    %v1718 = vunpack.c.l.b16 %v1057
    %v1719 = vunpack.c.h.b16 %v1057
    %v1720 = vunpack.c.l.b16 %v1058
    %v1721 = vunpack.c.h.b16 %v1058
    %v1722 = vunpack.c.l.b16 %v1059
    %v1723 = vunpack.c.h.b16 %v1059
    %v1724 = vunpack.c.l.b16 %v1060
    %v1725 = vunpack.c.h.b16 %v1060
    %v1726 = vunpack.c.l.b16 %v1061
    %v1727 = vunpack.c.h.b16 %v1061
    %v1728 = vunpack.c.l.b16 %v1062
    %v1729 = vunpack.c.h.b16 %v1062
    %v1730 = vunpack.c.l.b16 %v1063
    %v1731 = vunpack.c.h.b16 %v1063
    %v1732 = vunpack.c.l.b16 %v1064
    %v1733 = vunpack.c.h.b16 %v1064
    %v1734 = vunpack.c.l.b16 %v1065
    %v1735 = vunpack.c.h.b16 %v1065
    %v1736 = vunpack.c.l.b16 %v1066
    %v1737 = vunpack.c.h.b16 %v1066
    %v1738 = vunpack.c.l.b16 %v1067
    %v1739 = vunpack.c.h.b16 %v1067
    %v1740 = vunpack.c.l.b16 %v1068
    %v1741 = vunpack.c.h.b16 %v1068
    %v1742 = vunpack.c.l.b16 %v1069
    %v1743 = vunpack.c.h.b16 %v1069
    %v1744 = vunpack.c.l.b16 %v1070
    %v1745 = vunpack.c.h.b16 %v1070
    %v1746 = vunpack.c.l.b16 %v1071
    %v1747 = vunpack.c.h.b16 %v1071
    %v1748 = vunpack.c.l.b16 %v1072
    %v1749 = vunpack.c.h.b16 %v1072
    %v1750 = vunpack.c.l.b16 %v1073
    %v1751 = vunpack.c.h.b16 %v1073
    %v1752 = vunpack.c.l.b16 %v1074
    %v1753 = vunpack.c.h.b16 %v1074
    %v1754 = vunpack.c.l.b16 %v1075
    %v1755 = vunpack.c.h.b16 %v1075
    %v1756 = vunpack.c.l.b16 %v1076
    %v1757 = vunpack.c.h.b16 %v1076
    %v1758 = vunpack.c.l.b16 %v1077
    %v1759 = vunpack.c.h.b16 %v1077
    %v1760 = vunpack.c.l.b16 %v1078
    %v1761 = vunpack.c.h.b16 %v1078
    %v1762 = vunpack.c.l.b16 %v1079
    %v1763 = vunpack.c.h.b16 %v1079
    %v1764 = vunpack.c.l.b16 %v1080
    %v1765 = vunpack.c.h.b16 %v1080
    %v1766 = vunpack.c.l.b16 %v1081
    %v1767 = vunpack.c.h.b16 %v1081
    %v1768 = vunpack.c.l.b16 %v1082
    %v1769 = vunpack.c.h.b16 %v1082
    %v1770 = vunpack.c.l.b16 %v1083
    %v1771 = vunpack.c.h.b16 %v1083
    %v1772 = vunpack.c.l.b16 %v1084
    %v1773 = vunpack.c.h.b16 %v1084
    %v1774 = vunpack.c.l.b16 %v1085
    %v1775 = vunpack.c.h.b16 %v1085
    %v1776 = vunpack.c.l.b16 %v1086
    %v1777 = vunpack.c.h.b16 %v1086
    %v1778 = vunpack.c.l.b16 %v1087
    %v1779 = vunpack.c.h.b16 %v1087
    %v1780 = vunpack.c.l.b16 %v1088
    %v1781 = vunpack.c.h.b16 %v1088
    %v1782 = vunpack.c.l.b16 %v1089
    %v1783 = vunpack.c.h.b16 %v1089
    %v1784 = vunpack.c.l.b16 %v1090
    %v1785 = vunpack.c.h.b16 %v1090
    %v1786 = vunpack.c.l.b16 %v1091
    %v1787 = vunpack.c.h.b16 %v1091
    %v1788 = vunpack.c.l.b16 %v1092
    %v1789 = vunpack.c.h.b16 %v1092
    %v1790 = vunpack.c.l.b16 %v1093
    %v1791 = vunpack.c.h.b16 %v1093
    %v1792 = vunpack.c.l.b16 %v1094
    %v1793 = vunpack.c.h.b16 %v1094
    %v1794 = vunpack.c.l.b16 %v1095
    %v1795 = vunpack.c.h.b16 %v1095
    %v1796 = vunpack.c.l.b16 %v1096
    %v1797 = vunpack.c.h.b16 %v1096
    %v1798 = vunpack.c.l.b16 %v1097
    %v1799 = vunpack.c.h.b16 %v1097
    %v1800 = vunpack.c.l.b16 %v1098
    %v1801 = vunpack.c.h.b16 %v1098
    %v1802 = vunpack.c.l.b16 %v1099
    %v1803 = vunpack.c.h.b16 %v1099
    %v1804 = vunpack.c.l.b16 %v1100
    %v1805 = vunpack.c.h.b16 %v1100
    %v1806 = vunpack.c.l.b16 %v1101
    %v1807 = vunpack.c.h.b16 %v1101
    %v1808 = vunpack.c.l.b16 %v1102
    %v1809 = vunpack.c.h.b16 %v1102
    %v1810 = vunpack.c.l.b16 %v1103
    %v1811 = vunpack.c.h.b16 %v1103
    %v1812 = vunpack.c.l.b16 %v1104
    %v1813 = vunpack.c.h.b16 %v1104
    %v1814 = vunpack.c.l.b16 %v1105
    %v1815 = vunpack.c.h.b16 %v1105
    %v1816 = vunpack.c.l.b16 %v1106
    %v1817 = vunpack.c.h.b16 %v1106
    %v1818 = vunpack.c.l.b16 %v1107
    %v1819 = vunpack.c.h.b16 %v1107
    %v1820 = vunpack.c.l.b16 %v1108
    %v1821 = vunpack.c.h.b16 %v1108
    %v1822 = vunpack.c.l.b16 %v1109
    %v1823 = vunpack.c.h.b16 %v1109
    %v1824 = vunpack.c.l.b16 %v1110
    %v1825 = vunpack.c.h.b16 %v1110
    %v1826 = vunpack.c.l.b16 %v1111
    %v1827 = vunpack.c.h.b16 %v1111
    %v1828 = vunpack.c.l.b16 %v1112
    %v1829 = vunpack.c.h.b16 %v1112
    %v1830 = vunpack.c.l.b16 %v1113
    %v1831 = vunpack.c.h.b16 %v1113
    %v1832 = vunpack.c.l.b16 %v1114
    %v1833 = vunpack.c.h.b16 %v1114
    %v1834 = vunpack.c.l.b16 %v1115
    %v1835 = vunpack.c.h.b16 %v1115
    %v1836 = vunpack.c.l.b16 %v1116
    %v1837 = vunpack.c.h.b16 %v1116
    %v1838 = vunpack.c.l.b16 %v1117
    %v1839 = vunpack.c.h.b16 %v1117
    %v1840 = vunpack.c.l.b16 %v1118
    %v1841 = vunpack.c.h.b16 %v1118
    %v1842 = vunpack.c.l.b16 %v1119
    %v1843 = vunpack.c.h.b16 %v1119
    %v1844 = vunpack.c.l.b16 %v1120
    %v1845 = vunpack.c.h.b16 %v1120
    %v1846 = vunpack.c.l.b16 %v1121
    %v1847 = vunpack.c.h.b16 %v1121
    %v1848 = vunpack.c.l.b16 %v1122
    %v1849 = vunpack.c.h.b16 %v1122
    %v1850 = vunpack.c.l.b16 %v1123
    %v1851 = vunpack.c.h.b16 %v1123
    %v1852 = vunpack.c.l.b16 %v1124
    %v1853 = vunpack.c.h.b16 %v1124
    %v1854 = vunpack.c.l.b16 %v1125
    %v1855 = vunpack.c.h.b16 %v1125
    %v1856 = vunpack.c.l.b16 %v1126
    %v1857 = vunpack.c.h.b16 %v1126
    %v1858 = vunpack.c.l.b16 %v1127
    %v1859 = vunpack.c.h.b16 %v1127
    %v1860 = vunpack.c.l.b16 %v1128
    %v1861 = vunpack.c.h.b16 %v1128
    %v1862 = vunpack.c.l.b16 %v1129
    %v1863 = vunpack.c.h.b16 %v1129
    %v1864 = vunpack.c.l.b16 %v1130
    %v1865 = vunpack.c.h.b16 %v1130
    %v1866 = vunpack.c.l.b16 %v1131
    %v1867 = vunpack.c.h.b16 %v1131
    %v1868 = vunpack.c.l.b16 %v1132
    %v1869 = vunpack.c.h.b16 %v1132
    %v1870 = vunpack.c.l.b16 %v1133
    %v1871 = vunpack.c.h.b16 %v1133
    %v1872 = vunpack.c.l.b16 %v1134
    %v1873 = vunpack.c.h.b16 %v1134
    %v1874 = vunpack.c.l.b16 %v1135
    %v1875 = vunpack.c.h.b16 %v1135
    %v1876 = vunpack.c.l.b16 %v1136
    %v1877 = vunpack.c.h.b16 %v1136
    %v1878 = vunpack.c.l.b16 %v1137
    %v1879 = vunpack.c.h.b16 %v1137
    %v1880 = vunpack.c.l.b16 %v1138
    %v1881 = vunpack.c.h.b16 %v1138
    %v1882 = vunpack.c.l.b16 %v1139
    %v1883 = vunpack.c.h.b16 %v1139
    %v1884 = vunpack.c.l.b16 %v1140
    %v1885 = vunpack.c.h.b16 %v1140
    %v1886 = vunpack.c.l.b16 %v1141
    %v1887 = vunpack.c.h.b16 %v1141
    %v1888 = vunpack.c.l.b16 %v1142
    %v1889 = vunpack.c.h.b16 %v1142
    %v1890 = vunpack.c.l.b16 %v1143
    %v1891 = vunpack.c.h.b16 %v1143
    %v1892 = vunpack.c.l.b16 %v1144
    %v1893 = vunpack.c.h.b16 %v1144
    %v1894 = vunpack.c.l.b16 %v1145
    %v1895 = vunpack.c.h.b16 %v1145
    %v1896 = vunpack.c.l.b16 %v1146
    %v1897 = vunpack.c.h.b16 %v1146
    %v1898 = vunpack.c.l.b16 %v1147
    %v1899 = vunpack.c.h.b16 %v1147
    %v1900 = vunpack.c.l.b16 %v1148
    %v1901 = vunpack.c.h.b16 %v1148
    %v1902 = vunpack.c.l.b16 %v1149
    %v1903 = vunpack.c.h.b16 %v1149
    %v1904 = vunpack.c.l.b16 %v1150
    %v1905 = vunpack.c.h.b16 %v1150
    %v1906 = vunpack.c.l.b16 %v1151
    %v1907 = vunpack.c.h.b16 %v1151
    %v1908 = vunpack.c.l.b16 %v1152
    %v1909 = vunpack.c.h.b16 %v1152
    %v1910 = vunpack.c.l.b16 %v1153
    %v1911 = vunpack.c.h.b16 %v1153
    %v1912 = vunpack.c.l.b16 %v1154
    %v1913 = vunpack.c.h.b16 %v1154
    %v1914 = vunpack.c.l.b16 %v1155
    %v1915 = vunpack.c.h.b16 %v1155
    %v1916 = vunpack.c.l.b16 %v1156
    %v1917 = vunpack.c.h.b16 %v1156
    %v1918 = vunpack.c.l.b16 %v1157
    %v1919 = vunpack.c.h.b16 %v1157
    %v1920 = vunpack.c.l.b16 %v1158
    %v1921 = vunpack.c.h.b16 %v1158
    %v1922 = vunpack.c.l.b16 %v1159
    %v1923 = vunpack.c.h.b16 %v1159
    %v1924 = vunpack.c.l.b16 %v1160
    %v1925 = vunpack.c.h.b16 %v1160
    %v1926 = vunpack.c.l.b16 %v1161
    %v1927 = vunpack.c.h.b16 %v1161
    %v1928 = vunpack.c.l.b16 %v1162
    %v1929 = vunpack.c.h.b16 %v1162
    %v1930 = vunpack.c.l.b16 %v1163
    %v1931 = vunpack.c.h.b16 %v1163
    %v1932 = vpack.c.b16 %v1424, %v1420
    %v1933 = vpack.c.b16 %v1425, %v1421
    %v1934 = vpack.c.b16 %v1426, %v1422
    %v1935 = vpack.c.b16 %v1427, %v1423
    %v1936 = vpack.c.b16 %v1432, %v1428
    %v1937 = vpack.c.b16 %v1433, %v1429
    %v1938 = vpack.c.b16 %v1434, %v1430
    %v1939 = vpack.c.b16 %v1435, %v1431
    %v1940 = vpack.c.b16 %v1440, %v1436
    %v1941 = vpack.c.b16 %v1441, %v1437
    %v1942 = vpack.c.b16 %v1442, %v1438
    %v1943 = vpack.c.b16 %v1443, %v1439
    %v1944 = vpack.c.b16 %v1448, %v1444
    %v1945 = vpack.c.b16 %v1449, %v1445
    %v1946 = vpack.c.b16 %v1450, %v1446
    %v1947 = vpack.c.b16 %v1451, %v1447
    %v1948 = vpack.c.b16 %v1456, %v1452
    %v1949 = vpack.c.b16 %v1457, %v1453
    %v1950 = vpack.c.b16 %v1458, %v1454
    %v1951 = vpack.c.b16 %v1459, %v1455
    %v1952 = vpack.c.b16 %v1464, %v1460
    %v1953 = vpack.c.b16 %v1465, %v1461
    %v1954 = vpack.c.b16 %v1466, %v1462
    %v1955 = vpack.c.b16 %v1467, %v1463
    %v1956 = vpack.c.b16 %v1472, %v1468
    %v1957 = vpack.c.b16 %v1473, %v1469
    %v1958 = vpack.c.b16 %v1474, %v1470
    %v1959 = vpack.c.b16 %v1475, %v1471
    %v1960 = vpack.c.b16 %v1480, %v1476
    %v1961 = vpack.c.b16 %v1481, %v1477
    %v1962 = vpack.c.b16 %v1482, %v1478
    %v1963 = vpack.c.b16 %v1483, %v1479
    %v1964 = vpack.c.b16 %v1488, %v1484
    %v1965 = vpack.c.b16 %v1489, %v1485
    %v1966 = vpack.c.b16 %v1490, %v1486
    %v1967 = vpack.c.b16 %v1491, %v1487
    %v1968 = vpack.c.b16 %v1496, %v1492
    %v1969 = vpack.c.b16 %v1497, %v1493
    %v1970 = vpack.c.b16 %v1498, %v1494
    %v1971 = vpack.c.b16 %v1499, %v1495
    %v1972 = vpack.c.b16 %v1504, %v1500
    %v1973 = vpack.c.b16 %v1505, %v1501
    %v1974 = vpack.c.b16 %v1506, %v1502
    %v1975 = vpack.c.b16 %v1507, %v1503
    %v1976 = vpack.c.b16 %v1512, %v1508
    %v1977 = vpack.c.b16 %v1513, %v1509
    %v1978 = vpack.c.b16 %v1514, %v1510
    %v1979 = vpack.c.b16 %v1515, %v1511
    %v1980 = vpack.c.b16 %v1520, %v1516
    %v1981 = vpack.c.b16 %v1521, %v1517
    %v1982 = vpack.c.b16 %v1522, %v1518
    %v1983 = vpack.c.b16 %v1523, %v1519
    %v1984 = vpack.c.b16 %v1528, %v1524
    %v1985 = vpack.c.b16 %v1529, %v1525
    %v1986 = vpack.c.b16 %v1530, %v1526
    %v1987 = vpack.c.b16 %v1531, %v1527
    %v1988 = vpack.c.b16 %v1536, %v1532
    %v1989 = vpack.c.b16 %v1537, %v1533
    %v1990 = vpack.c.b16 %v1538, %v1534
    %v1991 = vpack.c.b16 %v1539, %v1535
    %v1992 = vpack.c.b16 %v1544, %v1540
    %v1993 = vpack.c.b16 %v1545, %v1541
    %v1994 = vpack.c.b16 %v1546, %v1542
    %v1995 = vpack.c.b16 %v1547, %v1543
    %v1996 = vpack.c.b16 %v1552, %v1548
    %v1997 = vpack.c.b16 %v1553, %v1549
    %v1998 = vpack.c.b16 %v1554, %v1550
    %v1999 = vpack.c.b16 %v1555, %v1551
    %v2000 = vpack.c.b16 %v1560, %v1556
    %v2001 = vpack.c.b16 %v1561, %v1557
    %v2002 = vpack.c.b16 %v1562, %v1558
    %v2003 = vpack.c.b16 %v1563, %v1559
    %v2004 = vpack.c.b16 %v1568, %v1564
    %v2005 = vpack.c.b16 %v1569, %v1565
    %v2006 = vpack.c.b16 %v1570, %v1566
    %v2007 = vpack.c.b16 %v1571, %v1567
    %v2008 = vpack.c.b16 %v1576, %v1572
    %v2009 = vpack.c.b16 %v1577, %v1573
    %v2010 = vpack.c.b16 %v1578, %v1574
    %v2011 = vpack.c.b16 %v1579, %v1575
    %v2012 = vpack.c.b16 %v1584, %v1580
    %v2013 = vpack.c.b16 %v1585, %v1581
    %v2014 = vpack.c.b16 %v1586, %v1582
    %v2015 = vpack.c.b16 %v1587, %v1583
    %v2016 = vpack.c.b16 %v1592, %v1588
    %v2017 = vpack.c.b16 %v1593, %v1589
    %v2018 = vpack.c.b16 %v1594, %v1590
    %v2019 = vpack.c.b16 %v1595, %v1591
    %v2020 = vpack.c.b16 %v1600, %v1596
    %v2021 = vpack.c.b16 %v1601, %v1597
    %v2022 = vpack.c.b16 %v1602, %v1598
    %v2023 = vpack.c.b16 %v1603, %v1599
    %v2024 = vpack.c.b16 %v1608, %v1604
    %v2025 = vpack.c.b16 %v1609, %v1605
    %v2026 = vpack.c.b16 %v1610, %v1606
    %v2027 = vpack.c.b16 %v1611, %v1607
    %v2028 = vpack.c.b16 %v1616, %v1612
    %v2029 = vpack.c.b16 %v1617, %v1613
    %v2030 = vpack.c.b16 %v1618, %v1614
    %v2031 = vpack.c.b16 %v1619, %v1615
    %v2032 = vpack.c.b16 %v1624, %v1620
    %v2033 = vpack.c.b16 %v1625, %v1621
    %v2034 = vpack.c.b16 %v1626, %v1622
    %v2035 = vpack.c.b16 %v1627, %v1623
    %v2036 = vpack.c.b16 %v1632, %v1628
    %v2037 = vpack.c.b16 %v1633, %v1629
    %v2038 = vpack.c.b16 %v1634, %v1630
    %v2039 = vpack.c.b16 %v1635, %v1631
    %v2040 = vpack.c.b16 %v1640, %v1636
    %v2041 = vpack.c.b16 %v1641, %v1637
    %v2042 = vpack.c.b16 %v1642, %v1638
    %v2043 = vpack.c.b16 %v1643, %v1639
    %v2044 = vpack.c.b16 %v1648, %v1644
    %v2045 = vpack.c.b16 %v1649, %v1645
    %v2046 = vpack.c.b16 %v1650, %v1646
    %v2047 = vpack.c.b16 %v1651, %v1647
    %v2048 = vpack.c.b16 %v1656, %v1652
    %v2049 = vpack.c.b16 %v1657, %v1653
    %v2050 = vpack.c.b16 %v1658, %v1654
    %v2051 = vpack.c.b16 %v1659, %v1655
    %v2052 = vpack.c.b16 %v1664, %v1660
    %v2053 = vpack.c.b16 %v1665, %v1661
    %v2054 = vpack.c.b16 %v1666, %v1662
    %v2055 = vpack.c.b16 %v1667, %v1663
    %v2056 = vpack.c.b16 %v1672, %v1668
    %v2057 = vpack.c.b16 %v1673, %v1669
    %v2058 = vpack.c.b16 %v1674, %v1670
    %v2059 = vpack.c.b16 %v1675, %v1671
    %v2060 = vpack.c.b16 %v1680, %v1676
    %v2061 = vpack.c.b16 %v1681, %v1677
    %v2062 = vpack.c.b16 %v1682, %v1678
    %v2063 = vpack.c.b16 %v1683, %v1679
    %v2064 = vpack.c.b16 %v1688, %v1684
    %v2065 = vpack.c.b16 %v1689, %v1685
    %v2066 = vpack.c.b16 %v1690, %v1686
    %v2067 = vpack.c.b16 %v1691, %v1687
    %v2068 = vpack.c.b16 %v1696, %v1692
    %v2069 = vpack.c.b16 %v1697, %v1693
    %v2070 = vpack.c.b16 %v1698, %v1694
    %v2071 = vpack.c.b16 %v1699, %v1695
    %v2072 = vpack.c.b16 %v1704, %v1700
    %v2073 = vpack.c.b16 %v1705, %v1701
    %v2074 = vpack.c.b16 %v1706, %v1702
    %v2075 = vpack.c.b16 %v1707, %v1703
    %v2076 = vpack.c.b16 %v1712, %v1708
    %v2077 = vpack.c.b16 %v1713, %v1709
    %v2078 = vpack.c.b16 %v1714, %v1710
    %v2079 = vpack.c.b16 %v1715, %v1711
    %v2080 = vpack.c.b16 %v1720, %v1716
    %v2081 = vpack.c.b16 %v1721, %v1717
    %v2082 = vpack.c.b16 %v1722, %v1718
    %v2083 = vpack.c.b16 %v1723, %v1719
    %v2084 = vpack.c.b16 %v1728, %v1724
    %v2085 = vpack.c.b16 %v1729, %v1725
    %v2086 = vpack.c.b16 %v1730, %v1726
    %v2087 = vpack.c.b16 %v1731, %v1727
    %v2088 = vpack.c.b16 %v1736, %v1732
    %v2089 = vpack.c.b16 %v1737, %v1733
    %v2090 = vpack.c.b16 %v1738, %v1734
    %v2091 = vpack.c.b16 %v1739, %v1735
    %v2092 = vpack.c.b16 %v1744, %v1740
    %v2093 = vpack.c.b16 %v1745, %v1741
    %v2094 = vpack.c.b16 %v1746, %v1742
    %v2095 = vpack.c.b16 %v1747, %v1743
    %v2096 = vpack.c.b16 %v1752, %v1748
    %v2097 = vpack.c.b16 %v1753, %v1749
    %v2098 = vpack.c.b16 %v1754, %v1750
    %v2099 = vpack.c.b16 %v1755, %v1751
    %v2100 = vpack.c.b16 %v1760, %v1756
    %v2101 = vpack.c.b16 %v1761, %v1757
    %v2102 = vpack.c.b16 %v1762, %v1758
    %v2103 = vpack.c.b16 %v1763, %v1759
    %v2104 = vpack.c.b16 %v1768, %v1764
    %v2105 = vpack.c.b16 %v1769, %v1765
    %v2106 = vpack.c.b16 %v1770, %v1766
    %v2107 = vpack.c.b16 %v1771, %v1767
    %v2108 = vpack.c.b16 %v1776, %v1772
    %v2109 = vpack.c.b16 %v1777, %v1773
    %v2110 = vpack.c.b16 %v1778, %v1774
    %v2111 = vpack.c.b16 %v1779, %v1775
    %v2112 = vpack.c.b16 %v1784, %v1780
    %v2113 = vpack.c.b16 %v1785, %v1781
    %v2114 = vpack.c.b16 %v1786, %v1782
    %v2115 = vpack.c.b16 %v1787, %v1783
    %v2116 = vpack.c.b16 %v1792, %v1788
    %v2117 = vpack.c.b16 %v1793, %v1789
    %v2118 = vpack.c.b16 %v1794, %v1790
    %v2119 = vpack.c.b16 %v1795, %v1791
    %v2120 = vpack.c.b16 %v1800, %v1796
    %v2121 = vpack.c.b16 %v1801, %v1797
    %v2122 = vpack.c.b16 %v1802, %v1798
    %v2123 = vpack.c.b16 %v1803, %v1799
    %v2124 = vpack.c.b16 %v1808, %v1804
    %v2125 = vpack.c.b16 %v1809, %v1805
    %v2126 = vpack.c.b16 %v1810, %v1806
    %v2127 = vpack.c.b16 %v1811, %v1807
    %v2128 = vpack.c.b16 %v1816, %v1812
    %v2129 = vpack.c.b16 %v1817, %v1813
    %v2130 = vpack.c.b16 %v1818, %v1814
    %v2131 = vpack.c.b16 %v1819, %v1815
    %v2132 = vpack.c.b16 %v1824, %v1820
    %v2133 = vpack.c.b16 %v1825, %v1821
    %v2134 = vpack.c.b16 %v1826, %v1822
    %v2135 = vpack.c.b16 %v1827, %v1823
    %v2136 = vpack.c.b16 %v1832, %v1828
    %v2137 = vpack.c.b16 %v1833, %v1829
    %v2138 = vpack.c.b16 %v1834, %v1830
    %v2139 = vpack.c.b16 %v1835, %v1831
    %v2140 = vpack.c.b16 %v1840, %v1836
    %v2141 = vpack.c.b16 %v1841, %v1837
    %v2142 = vpack.c.b16 %v1842, %v1838
    %v2143 = vpack.c.b16 %v1843, %v1839
    %v2144 = vpack.c.b16 %v1848, %v1844
    %v2145 = vpack.c.b16 %v1849, %v1845
    %v2146 = vpack.c.b16 %v1850, %v1846
    %v2147 = vpack.c.b16 %v1851, %v1847
    %v2148 = vpack.c.b16 %v1856, %v1852
    %v2149 = vpack.c.b16 %v1857, %v1853
    %v2150 = vpack.c.b16 %v1858, %v1854
    %v2151 = vpack.c.b16 %v1859, %v1855
    %v2152 = vpack.c.b16 %v1864, %v1860
    %v2153 = vpack.c.b16 %v1865, %v1861
    %v2154 = vpack.c.b16 %v1866, %v1862
    %v2155 = vpack.c.b16 %v1867, %v1863
    %v2156 = vpack.c.b16 %v1872, %v1868
    %v2157 = vpack.c.b16 %v1873, %v1869
    %v2158 = vpack.c.b16 %v1874, %v1870
    %v2159 = vpack.c.b16 %v1875, %v1871
    %v2160 = vpack.c.b16 %v1880, %v1876
    %v2161 = vpack.c.b16 %v1881, %v1877
    %v2162 = vpack.c.b16 %v1882, %v1878
    %v2163 = vpack.c.b16 %v1883, %v1879
    %v2164 = vpack.c.b16 %v1888, %v1884
    %v2165 = vpack.c.b16 %v1889, %v1885
    %v2166 = vpack.c.b16 %v1890, %v1886
    %v2167 = vpack.c.b16 %v1891, %v1887
    %v2168 = vpack.c.b16 %v1896, %v1892
    %v2169 = vpack.c.b16 %v1897, %v1893
    %v2170 = vpack.c.b16 %v1898, %v1894
    %v2171 = vpack.c.b16 %v1899, %v1895
    %v2172 = vpack.c.b16 %v1904, %v1900
    %v2173 = vpack.c.b16 %v1905, %v1901
    %v2174 = vpack.c.b16 %v1906, %v1902
    %v2175 = vpack.c.b16 %v1907, %v1903
    %v2176 = vpack.c.b16 %v1912, %v1908
    %v2177 = vpack.c.b16 %v1913, %v1909
    %v2178 = vpack.c.b16 %v1914, %v1910
    %v2179 = vpack.c.b16 %v1915, %v1911
    %v2180 = vpack.c.b16 %v1920, %v1916
    %v2181 = vpack.c.b16 %v1921, %v1917
    %v2182 = vpack.c.b16 %v1922, %v1918
    %v2183 = vpack.c.b16 %v1923, %v1919
    %v2184 = vpack.c.b16 %v1928, %v1924
    %v2185 = vpack.c.b16 %v1929, %v1925
    %v2186 = vpack.c.b16 %v1930, %v1926
    %v2187 = vpack.c.b16 %v1931, %v1927
    %2444 = vmatprep.subr.bf16.mxu0 %v1961
    %2445 = vmatpush1.bf16.msra.mxu0 %v1960
    %2446 = vmatprep.subr.bf16.mxu0 %v1957
    %2447 = vmatpush1.bf16.msra.mxu0 %v1956
    %2448 = vmatprep.subr.bf16.mxu0 %v1953
    %2449 = vmatpush1.bf16.msra.mxu0 %v1952
    %2450 = vmatprep.subr.bf16.mxu0 %v1949
    %2451 = vmatpush1.bf16.msra.mxu0 %v1948
    %2452 = vmatprep.subr.bf16.mxu0 %v1945
    %2453 = vmatpush1.bf16.msra.mxu0 %v1944
    %2454 = vmatprep.subr.bf16.mxu0 %v1941
    %2455 = vmatpush1.bf16.msra.mxu0 %v1940
    %2456 = vmatprep.subr.bf16.mxu0 %v1937
    %2457 = vmatpush1.bf16.msra.mxu0 %v1936
    %2458 = vmatprep.subr.bf16.mxu0 %v1933
    %2459 = vmatpush1.bf16.msra.mxu0 %v1932
    %2460 = vmatprep.subr.bf16.mxu0 %v1993
    %2461 = vmatpush2.bf16.msra.mxu0 %v1992
    %2462 = vmatprep.subr.bf16.mxu0 %v1989
    %2463 = vmatpush2.bf16.msra.mxu0 %v1988
    %2464 = vmatprep.subr.bf16.mxu0 %v1985
    %2465 = vmatpush2.bf16.msra.mxu0 %v1984
    %2466 = vmatprep.subr.bf16.mxu0 %v1981
    %2467 = vmatpush2.bf16.msra.mxu0 %v1980
    %2468 = vmatprep.subr.bf16.mxu0 %v1977
    %2469 = vmatpush2.bf16.msra.mxu0 %v1976
    %2470 = vmatprep.subr.bf16.mxu0 %v1973
    %2471 = vmatpush2.bf16.msra.mxu0 %v1972
    %2472 = vmatprep.subr.bf16.mxu0 %v1969
    %2473 = vmatpush2.bf16.msra.mxu0 %v1968
    %2474 = vmatprep.subr.bf16.mxu0 %v1965
    %2475 = vmatpush2.bf16.msra.mxu0 %v1964
    %2476 = vmatprep.mubr.bf16.mxu0 %v901
    %2477 = vmatmul.mubr.bf16.gmra.mxu0 %v900
    %v2478 = vpop.f32.mrf.mxu0
    %v2479 = vadd.f32 0.0, %v2478
    %v2480 = vpop.f32.mrf.mxu0
    %v2481 = vadd.f32 0.0, %v2480
    %v2482 = vpop.f32.mrf.mxu0
    %v2483 = vpop.f32.mrf.mxu0
    %2484 = vdwg.mxu0
    %2485 = vmatprep.subr.bf16.mxu0 %v2025
    %2486 = vmatpush1.bf16.msra.mxu0 %v2024
    %2487 = vmatprep.subr.bf16.mxu0 %v2021
    %2488 = vmatpush1.bf16.msra.mxu0 %v2020
    %2489 = vmatprep.subr.bf16.mxu0 %v2017
    %2490 = vmatpush1.bf16.msra.mxu0 %v2016
    %2491 = vmatprep.subr.bf16.mxu0 %v2013
    %2492 = vmatpush1.bf16.msra.mxu0 %v2012
    %2493 = vmatprep.subr.bf16.mxu0 %v2009
    %2494 = vmatpush1.bf16.msra.mxu0 %v2008
    %2495 = vmatprep.subr.bf16.mxu0 %v2005
    %2496 = vmatpush1.bf16.msra.mxu0 %v2004
    %2497 = vmatprep.subr.bf16.mxu0 %v2001
    %2498 = vmatpush1.bf16.msra.mxu0 %v2000
    %2499 = vmatprep.subr.bf16.mxu0 %v1997
    %2500 = vmatpush1.bf16.msra.mxu0 %v1996
    %2501 = vmatprep.subr.bf16.mxu0 %v2057
    %2502 = vmatpush2.bf16.msra.mxu0 %v2056
    %2503 = vmatprep.subr.bf16.mxu0 %v2053
    %2504 = vmatpush2.bf16.msra.mxu0 %v2052
    %2505 = vmatprep.subr.bf16.mxu0 %v2049
    %2506 = vmatpush2.bf16.msra.mxu0 %v2048
    %2507 = vmatprep.subr.bf16.mxu0 %v2045
    %2508 = vmatpush2.bf16.msra.mxu0 %v2044
    %2509 = vmatprep.subr.bf16.mxu0 %v2041
    %2510 = vmatpush2.bf16.msra.mxu0 %v2040
    %2511 = vmatprep.subr.bf16.mxu0 %v2037
    %2512 = vmatpush2.bf16.msra.mxu0 %v2036
    %2513 = vmatprep.subr.bf16.mxu0 %v2033
    %2514 = vmatpush2.bf16.msra.mxu0 %v2032
    %2515 = vmatprep.subr.bf16.mxu0 %v2029
    %2516 = vmatpush2.bf16.msra.mxu0 %v2028
    %2517 = vmatprep.mubr.bf16.mxu0 %v903
    %2518 = vmatmul.mubr.bf16.gmra.mxu0 %v902
    %v2519 = vpop.f32.mrf.mxu0
    %v2520 = vadd.f32 %v2479, %v2519
    %v2521 = vpop.f32.mrf.mxu0
    %v2522 = vadd.f32 %v2481, %v2521
    %v2523 = vpop.f32.mrf.mxu0
    %v2524 = vpop.f32.mrf.mxu0
    %2525 = vdwg.mxu0
    %2526 = vmatprep.subr.bf16.mxu0 %v2089
    %2527 = vmatpush1.bf16.msra.mxu0 %v2088
    %2528 = vmatprep.subr.bf16.mxu0 %v2085
    %2529 = vmatpush1.bf16.msra.mxu0 %v2084
    %2530 = vmatprep.subr.bf16.mxu0 %v2081
    %2531 = vmatpush1.bf16.msra.mxu0 %v2080
    %2532 = vmatprep.subr.bf16.mxu0 %v2077
    %2533 = vmatpush1.bf16.msra.mxu0 %v2076
    %2534 = vmatprep.subr.bf16.mxu0 %v2073
    %2535 = vmatpush1.bf16.msra.mxu0 %v2072
    %2536 = vmatprep.subr.bf16.mxu0 %v2069
    %2537 = vmatpush1.bf16.msra.mxu0 %v2068
    %2538 = vmatprep.subr.bf16.mxu0 %v2065
    %2539 = vmatpush1.bf16.msra.mxu0 %v2064
    %2540 = vmatprep.subr.bf16.mxu0 %v2061
    %2541 = vmatpush1.bf16.msra.mxu0 %v2060
    %2542 = vmatprep.subr.bf16.mxu0 %v2121
    %2543 = vmatpush2.bf16.msra.mxu0 %v2120
    %2544 = vmatprep.subr.bf16.mxu0 %v2117
    %2545 = vmatpush2.bf16.msra.mxu0 %v2116
    %2546 = vmatprep.subr.bf16.mxu0 %v2113
    %2547 = vmatpush2.bf16.msra.mxu0 %v2112
    %2548 = vmatprep.subr.bf16.mxu0 %v2109
    %2549 = vmatpush2.bf16.msra.mxu0 %v2108
    %2550 = vmatprep.subr.bf16.mxu0 %v2105
    %2551 = vmatpush2.bf16.msra.mxu0 %v2104
    %2552 = vmatprep.subr.bf16.mxu0 %v2101
    %2553 = vmatpush2.bf16.msra.mxu0 %v2100
    %2554 = vmatprep.subr.bf16.mxu0 %v2097
    %2555 = vmatpush2.bf16.msra.mxu0 %v2096
    %2556 = vmatprep.subr.bf16.mxu0 %v2093
    %2557 = vmatpush2.bf16.msra.mxu0 %v2092
    %2558 = vmatprep.mubr.bf16.mxu0 %v905
    %2559 = vmatmul.mubr.bf16.gmra.mxu0 %v904
    %v2560 = vpop.f32.mrf.mxu0
    %v2561 = vadd.f32 %v2520, %v2560
    %v2562 = vpop.f32.mrf.mxu0
    %v2563 = vadd.f32 %v2522, %v2562
    %v2564 = vpop.f32.mrf.mxu0
    %v2565 = vpop.f32.mrf.mxu0
    %2566 = vdwg.mxu0
    %2567 = vmatprep.subr.bf16.mxu0 %v2153
    %2568 = vmatpush1.bf16.msra.mxu0 %v2152
    %2569 = vmatprep.subr.bf16.mxu0 %v2149
    %2570 = vmatpush1.bf16.msra.mxu0 %v2148
    %2571 = vmatprep.subr.bf16.mxu0 %v2145
    %2572 = vmatpush1.bf16.msra.mxu0 %v2144
    %2573 = vmatprep.subr.bf16.mxu0 %v2141
    %2574 = vmatpush1.bf16.msra.mxu0 %v2140
    %2575 = vmatprep.subr.bf16.mxu0 %v2137
    %2576 = vmatpush1.bf16.msra.mxu0 %v2136
    %2577 = vmatprep.subr.bf16.mxu0 %v2133
    %2578 = vmatpush1.bf16.msra.mxu0 %v2132
    %2579 = vmatprep.subr.bf16.mxu0 %v2129
    %2580 = vmatpush1.bf16.msra.mxu0 %v2128
    %2581 = vmatprep.subr.bf16.mxu0 %v2125
    %2582 = vmatpush1.bf16.msra.mxu0 %v2124
    %2583 = vmatprep.subr.bf16.mxu0 %v2185
    %2584 = vmatpush2.bf16.msra.mxu0 %v2184
    %2585 = vmatprep.subr.bf16.mxu0 %v2181
    %2586 = vmatpush2.bf16.msra.mxu0 %v2180
    %2587 = vmatprep.subr.bf16.mxu0 %v2177
    %2588 = vmatpush2.bf16.msra.mxu0 %v2176
    %2589 = vmatprep.subr.bf16.mxu0 %v2173
    %2590 = vmatpush2.bf16.msra.mxu0 %v2172
    %2591 = vmatprep.subr.bf16.mxu0 %v2169
    %2592 = vmatpush2.bf16.msra.mxu0 %v2168
    %2593 = vmatprep.subr.bf16.mxu0 %v2165
    %2594 = vmatpush2.bf16.msra.mxu0 %v2164
    %2595 = vmatprep.subr.bf16.mxu0 %v2161
    %2596 = vmatpush2.bf16.msra.mxu0 %v2160
    %2597 = vmatprep.subr.bf16.mxu0 %v2157
    %2598 = vmatpush2.bf16.msra.mxu0 %v2156
    %2599 = vmatprep.mubr.bf16.mxu0 %v907
    %2600 = vmatmul.mubr.bf16.gmra.mxu0 %v906
    %v2601 = vpop.f32.mrf.mxu0
    %v2602 = vadd.f32 %v2561, %v2601
    %v2603 = vpop.f32.mrf.mxu0
    %v2604 = vadd.f32 %v2563, %v2603
    %v2605 = vpop.f32.mrf.mxu0
    %v2606 = vpop.f32.mrf.mxu0
    %2607 = vdwg.mxu0
    %2608 = vmatprep.subr.bf16.mxu0 %v1963
    %2609 = vmatpush1.bf16.msra.mxu0 %v1962
    %2610 = vmatprep.subr.bf16.mxu0 %v1959
    %2611 = vmatpush1.bf16.msra.mxu0 %v1958
    %2612 = vmatprep.subr.bf16.mxu0 %v1955
    %2613 = vmatpush1.bf16.msra.mxu0 %v1954
    %2614 = vmatprep.subr.bf16.mxu0 %v1951
    %2615 = vmatpush1.bf16.msra.mxu0 %v1950
    %2616 = vmatprep.subr.bf16.mxu0 %v1947
    %2617 = vmatpush1.bf16.msra.mxu0 %v1946
    %2618 = vmatprep.subr.bf16.mxu0 %v1943
    %2619 = vmatpush1.bf16.msra.mxu0 %v1942
    %2620 = vmatprep.subr.bf16.mxu0 %v1939
    %2621 = vmatpush1.bf16.msra.mxu0 %v1938
    %2622 = vmatprep.subr.bf16.mxu0 %v1935
    %2623 = vmatpush1.bf16.msra.mxu0 %v1934
    %2624 = vmatprep.subr.bf16.mxu0 %v1995
    %2625 = vmatpush2.bf16.msra.mxu0 %v1994
    %2626 = vmatprep.subr.bf16.mxu0 %v1991
    %2627 = vmatpush2.bf16.msra.mxu0 %v1990
    %2628 = vmatprep.subr.bf16.mxu0 %v1987
    %2629 = vmatpush2.bf16.msra.mxu0 %v1986
    %2630 = vmatprep.subr.bf16.mxu0 %v1983
    %2631 = vmatpush2.bf16.msra.mxu0 %v1982
    %2632 = vmatprep.subr.bf16.mxu0 %v1979
    %2633 = vmatpush2.bf16.msra.mxu0 %v1978
    %2634 = vmatprep.subr.bf16.mxu0 %v1975
    %2635 = vmatpush2.bf16.msra.mxu0 %v1974
    %2636 = vmatprep.subr.bf16.mxu0 %v1971
    %2637 = vmatpush2.bf16.msra.mxu0 %v1970
    %2638 = vmatprep.subr.bf16.mxu0 %v1967
    %2639 = vmatpush2.bf16.msra.mxu0 %v1966
    %2640 = vmatprep.mubr.bf16.mxu0 %v901
    %2641 = vmatmul.mubr.bf16.gmra.mxu0 %v900
    %v2642 = vpop.f32.mrf.mxu0
    %v2643 = vadd.f32 0.0, %v2642
    %v2644 = vpop.f32.mrf.mxu0
    %v2645 = vadd.f32 0.0, %v2644
    %v2646 = vpop.f32.mrf.mxu0
    %v2647 = vpop.f32.mrf.mxu0
    %2648 = vdwg.mxu0
    %2649 = vmatprep.subr.bf16.mxu0 %v2027
    %2650 = vmatpush1.bf16.msra.mxu0 %v2026
    %2651 = vmatprep.subr.bf16.mxu0 %v2023
    %2652 = vmatpush1.bf16.msra.mxu0 %v2022
    %2653 = vmatprep.subr.bf16.mxu0 %v2019
    %2654 = vmatpush1.bf16.msra.mxu0 %v2018
    %2655 = vmatprep.subr.bf16.mxu0 %v2015
    %2656 = vmatpush1.bf16.msra.mxu0 %v2014
    %2657 = vmatprep.subr.bf16.mxu0 %v2011
    %2658 = vmatpush1.bf16.msra.mxu0 %v2010
    %2659 = vmatprep.subr.bf16.mxu0 %v2007
    %2660 = vmatpush1.bf16.msra.mxu0 %v2006
    %2661 = vmatprep.subr.bf16.mxu0 %v2003
    %2662 = vmatpush1.bf16.msra.mxu0 %v2002
    %2663 = vmatprep.subr.bf16.mxu0 %v1999
    %2664 = vmatpush1.bf16.msra.mxu0 %v1998
    %2665 = vmatprep.subr.bf16.mxu0 %v2059
    %2666 = vmatpush2.bf16.msra.mxu0 %v2058
    %2667 = vmatprep.subr.bf16.mxu0 %v2055
    %2668 = vmatpush2.bf16.msra.mxu0 %v2054
    %2669 = vmatprep.subr.bf16.mxu0 %v2051
    %2670 = vmatpush2.bf16.msra.mxu0 %v2050
    %2671 = vmatprep.subr.bf16.mxu0 %v2047
    %2672 = vmatpush2.bf16.msra.mxu0 %v2046
    %2673 = vmatprep.subr.bf16.mxu0 %v2043
    %2674 = vmatpush2.bf16.msra.mxu0 %v2042
    %2675 = vmatprep.subr.bf16.mxu0 %v2039
    %2676 = vmatpush2.bf16.msra.mxu0 %v2038
    %2677 = vmatprep.subr.bf16.mxu0 %v2035
    %2678 = vmatpush2.bf16.msra.mxu0 %v2034
    %2679 = vmatprep.subr.bf16.mxu0 %v2031
    %2680 = vmatpush2.bf16.msra.mxu0 %v2030
    %2681 = vmatprep.mubr.bf16.mxu0 %v903
    %2682 = vmatmul.mubr.bf16.gmra.mxu0 %v902
    %v2683 = vpop.f32.mrf.mxu0
    %v2684 = vadd.f32 %v2643, %v2683
    %v2685 = vpop.f32.mrf.mxu0
    %v2686 = vadd.f32 %v2645, %v2685
    %v2687 = vpop.f32.mrf.mxu0
    %v2688 = vpop.f32.mrf.mxu0
    %2689 = vdwg.mxu0
    %2690 = vmatprep.subr.bf16.mxu0 %v2091
    %2691 = vmatpush1.bf16.msra.mxu0 %v2090
    %2692 = vmatprep.subr.bf16.mxu0 %v2087
    %2693 = vmatpush1.bf16.msra.mxu0 %v2086
    %2694 = vmatprep.subr.bf16.mxu0 %v2083
    %2695 = vmatpush1.bf16.msra.mxu0 %v2082
    %2696 = vmatprep.subr.bf16.mxu0 %v2079
    %2697 = vmatpush1.bf16.msra.mxu0 %v2078
    %2698 = vmatprep.subr.bf16.mxu0 %v2075
    %2699 = vmatpush1.bf16.msra.mxu0 %v2074
    %2700 = vmatprep.subr.bf16.mxu0 %v2071
    %2701 = vmatpush1.bf16.msra.mxu0 %v2070
    %2702 = vmatprep.subr.bf16.mxu0 %v2067
    %2703 = vmatpush1.bf16.msra.mxu0 %v2066
    %2704 = vmatprep.subr.bf16.mxu0 %v2063
    %2705 = vmatpush1.bf16.msra.mxu0 %v2062
    %2706 = vmatprep.subr.bf16.mxu0 %v2123
    %2707 = vmatpush2.bf16.msra.mxu0 %v2122
    %2708 = vmatprep.subr.bf16.mxu0 %v2119
    %2709 = vmatpush2.bf16.msra.mxu0 %v2118
    %2710 = vmatprep.subr.bf16.mxu0 %v2115
    %2711 = vmatpush2.bf16.msra.mxu0 %v2114
    %2712 = vmatprep.subr.bf16.mxu0 %v2111
    %2713 = vmatpush2.bf16.msra.mxu0 %v2110
    %2714 = vmatprep.subr.bf16.mxu0 %v2107
    %2715 = vmatpush2.bf16.msra.mxu0 %v2106
    %2716 = vmatprep.subr.bf16.mxu0 %v2103
    %2717 = vmatpush2.bf16.msra.mxu0 %v2102
    %2718 = vmatprep.subr.bf16.mxu0 %v2099
    %2719 = vmatpush2.bf16.msra.mxu0 %v2098
    %2720 = vmatprep.subr.bf16.mxu0 %v2095
    %2721 = vmatpush2.bf16.msra.mxu0 %v2094
    %2722 = vmatprep.mubr.bf16.mxu0 %v905
    %2723 = vmatmul.mubr.bf16.gmra.mxu0 %v904
    %v2724 = vpop.f32.mrf.mxu0
    %v2725 = vadd.f32 %v2684, %v2724
    %v2726 = vpop.f32.mrf.mxu0
    %v2727 = vadd.f32 %v2686, %v2726
    %v2728 = vpop.f32.mrf.mxu0
    %v2729 = vpop.f32.mrf.mxu0
    %2730 = vdwg.mxu0
    %2731 = vmatprep.subr.bf16.mxu0 %v2155
    %2732 = vmatpush1.bf16.msra.mxu0 %v2154
    %2733 = vmatprep.subr.bf16.mxu0 %v2151
    %2734 = vmatpush1.bf16.msra.mxu0 %v2150
    %2735 = vmatprep.subr.bf16.mxu0 %v2147
    %2736 = vmatpush1.bf16.msra.mxu0 %v2146
    %2737 = vmatprep.subr.bf16.mxu0 %v2143
    %2738 = vmatpush1.bf16.msra.mxu0 %v2142
    %2739 = vmatprep.subr.bf16.mxu0 %v2139
    %2740 = vmatpush1.bf16.msra.mxu0 %v2138
    %2741 = vmatprep.subr.bf16.mxu0 %v2135
    %2742 = vmatpush1.bf16.msra.mxu0 %v2134
    %2743 = vmatprep.subr.bf16.mxu0 %v2131
    %2744 = vmatpush1.bf16.msra.mxu0 %v2130
    %2745 = vmatprep.subr.bf16.mxu0 %v2127
    %2746 = vmatpush1.bf16.msra.mxu0 %v2126
    %2747 = vmatprep.subr.bf16.mxu0 %v2187
    %2748 = vmatpush2.bf16.msra.mxu0 %v2186
    %2749 = vmatprep.subr.bf16.mxu0 %v2183
    %2750 = vmatpush2.bf16.msra.mxu0 %v2182
    %2751 = vmatprep.subr.bf16.mxu0 %v2179
    %2752 = vmatpush2.bf16.msra.mxu0 %v2178
    %2753 = vmatprep.subr.bf16.mxu0 %v2175
    %2754 = vmatpush2.bf16.msra.mxu0 %v2174
    %2755 = vmatprep.subr.bf16.mxu0 %v2171
    %2756 = vmatpush2.bf16.msra.mxu0 %v2170
    %2757 = vmatprep.subr.bf16.mxu0 %v2167
    %2758 = vmatpush2.bf16.msra.mxu0 %v2166
    %2759 = vmatprep.subr.bf16.mxu0 %v2163
    %2760 = vmatpush2.bf16.msra.mxu0 %v2162
    %2761 = vmatprep.subr.bf16.mxu0 %v2159
    %2762 = vmatpush2.bf16.msra.mxu0 %v2158
    %2763 = vmatprep.mubr.bf16.mxu0 %v907
    %2764 = vmatmul.mubr.bf16.gmra.mxu0 %v906
    %v2765 = vpop.f32.mrf.mxu0
    %v2766 = vadd.f32 %v2725, %v2765
    %v2767 = vpop.f32.mrf.mxu0
    %v2768 = vadd.f32 %v2727, %v2767
    %v2769 = vpop.f32.mrf.mxu0
    %v2770 = vpop.f32.mrf.mxu0
    %2771 = vdwg.mxu0
    %v2772 = vld [vmem:[%s5] sm:$0xf]
    %v2774 = vlaneseq
    %v2775 = vshrl.u32 %v2774, 7
    %v2776 = vsub.s32 0, %v2775
    %v2777 = vrot.slane %v2772, %v2776
    %v2778 = vlaneseq
    %v2779 = vshrl.u32 %v2778, 7
    %v2780 = vsub.s32 1, %v2779
    %v2781 = vrot.slane %v2772, %v2780
    %v2782 = vlaneseq
    %v2783 = vshrl.u32 %v2782, 7
    %v2784 = vsub.s32 2, %v2783
    %v2785 = vrot.slane %v2772, %v2784
    %v2786 = vlaneseq
    %v2787 = vshrl.u32 %v2786, 7
    %v2788 = vsub.s32 3, %v2787
    %v2789 = vrot.slane %v2772, %v2788
    %v2794 = vmul.f32 %v2602, %v2777
    %v2795 = vmul.f32 %v2604, %v2781
    %v2796 = vmul.f32 %v2766, %v2785
    %v2797 = vmul.f32 %v2768, %v2789
    %v2798 = vld [vmem:[%s6] sm:$0xf]
    %v2800 = vlaneseq
    %v2801 = vshrl.u32 %v2800, 7
    %v2802 = vsub.s32 0, %v2801
    %v2803 = vrot.slane %v2798, %v2802
    %v2804 = vlaneseq
    %v2805 = vshrl.u32 %v2804, 7
    %v2806 = vsub.s32 1, %v2805
    %v2807 = vrot.slane %v2798, %v2806
    %v2808 = vlaneseq
    %v2809 = vshrl.u32 %v2808, 7
    %v2810 = vsub.s32 2, %v2809
    %v2811 = vrot.slane %v2798, %v2810
    %v2812 = vlaneseq
    %v2813 = vshrl.u32 %v2812, 7
    %v2814 = vsub.s32 3, %v2813
    %v2815 = vrot.slane %v2798, %v2814
    %v2820 = vadd.f32 %v2794, %v2803
    %v2821 = vadd.f32 %v2795, %v2807
    %v2822 = vadd.f32 %v2796, %v2811
    %v2823 = vadd.f32 %v2797, %v2815
    %v2824 = vmax.f32 %v2820, 0.0
    %v2825 = vmax.f32 %v2821, 0.0
    %v2826 = vmax.f32 %v2822, 0.0
    %v2827 = vmax.f32 %v2823, 0.0
    %v2828 = vpack.c.bf16 %v2824, %v2824
    %v2829 = vpack.c.bf16 %v2825, %v2825
    %v2830 = vpack.c.bf16 %v2826, %v2826
    %v2831 = vpack.c.bf16 %v2827, %v2827
    %v2832 = vld [vmem:[%s7] sm:$0xf]
    %v2833 = vld [vmem:[%s7 + $0x4] sm:$0xf]
    %v2834 = vld [vmem:[%s7 + $0x8] sm:$0xf]
    %v2835 = vld [vmem:[%s7 + $0xc] sm:$0xf]
    %v2836 = vld [vmem:[%s7 + $0x10] sm:$0xf]
    %v2837 = vld [vmem:[%s7 + $0x14] sm:$0xf]
    %v2838 = vld [vmem:[%s7 + $0x18] sm:$0xf]
    %v2839 = vld [vmem:[%s7 + $0x1c] sm:$0xf]
    %v2840 = vld [vmem:[%s7 + $0x20] sm:$0xf]
    %v2841 = vld [vmem:[%s7 + $0x24] sm:$0xf]
    %v2842 = vld [vmem:[%s7 + $0x28] sm:$0xf]
    %v2843 = vld [vmem:[%s7 + $0x2c] sm:$0xf]
    %v2844 = vld [vmem:[%s7 + $0x30] sm:$0xf]
    %v2845 = vld [vmem:[%s7 + $0x34] sm:$0xf]
    %v2846 = vld [vmem:[%s7 + $0x38] sm:$0xf]
    %v2847 = vld [vmem:[%s7 + $0x3c] sm:$0xf]
    %v2848 = vld [vmem:[%s7 + $0x40] sm:$0xf]
    %v2849 = vld [vmem:[%s7 + $0x44] sm:$0xf]
    %v2850 = vld [vmem:[%s7 + $0x48] sm:$0xf]
    %v2851 = vld [vmem:[%s7 + $0x4c] sm:$0xf]
    %v2852 = vld [vmem:[%s7 + $0x50] sm:$0xf]
    %v2853 = vld [vmem:[%s7 + $0x54] sm:$0xf]
    %v2854 = vld [vmem:[%s7 + $0x58] sm:$0xf]
    %v2855 = vld [vmem:[%s7 + $0x5c] sm:$0xf]
    %v2856 = vld [vmem:[%s7 + $0x60] sm:$0xf]
    %v2857 = vld [vmem:[%s7 + $0x64] sm:$0xf]
    %v2858 = vld [vmem:[%s7 + $0x68] sm:$0xf]
    %v2859 = vld [vmem:[%s7 + $0x6c] sm:$0xf]
    %v2860 = vld [vmem:[%s7 + $0x70] sm:$0xf]
    %v2861 = vld [vmem:[%s7 + $0x74] sm:$0xf]
    %v2862 = vld [vmem:[%s7 + $0x78] sm:$0xf]
    %v2863 = vld [vmem:[%s7 + $0x7c] sm:$0xf]
    %v2864 = vld [vmem:[%s7 + $0x80] sm:$0xf]
    %v2865 = vld [vmem:[%s7 + $0x84] sm:$0xf]
    %v2866 = vld [vmem:[%s7 + $0x88] sm:$0xf]
    %v2867 = vld [vmem:[%s7 + $0x8c] sm:$0xf]
    %v2868 = vld [vmem:[%s7 + $0x90] sm:$0xf]
    %v2869 = vld [vmem:[%s7 + $0x94] sm:$0xf]
    %v2870 = vld [vmem:[%s7 + $0x98] sm:$0xf]
    %v2871 = vld [vmem:[%s7 + $0x9c] sm:$0xf]
    %v2872 = vld [vmem:[%s7 + $0xa0] sm:$0xf]
    %v2873 = vld [vmem:[%s7 + $0xa4] sm:$0xf]
    %v2874 = vld [vmem:[%s7 + $0xa8] sm:$0xf]
    %v2875 = vld [vmem:[%s7 + $0xac] sm:$0xf]
    %v2876 = vld [vmem:[%s7 + $0xb0] sm:$0xf]
    %v2877 = vld [vmem:[%s7 + $0xb4] sm:$0xf]
    %v2878 = vld [vmem:[%s7 + $0xb8] sm:$0xf]
    %v2879 = vld [vmem:[%s7 + $0xbc] sm:$0xf]
    %v2880 = vld [vmem:[%s7 + $0xc0] sm:$0xf]
    %v2881 = vld [vmem:[%s7 + $0xc4] sm:$0xf]
    %v2882 = vld [vmem:[%s7 + $0xc8] sm:$0xf]
    %v2883 = vld [vmem:[%s7 + $0xcc] sm:$0xf]
    %v2884 = vld [vmem:[%s7 + $0xd0] sm:$0xf]
    %v2885 = vld [vmem:[%s7 + $0xd4] sm:$0xf]
    %v2886 = vld [vmem:[%s7 + $0xd8] sm:$0xf]
    %v2887 = vld [vmem:[%s7 + $0xdc] sm:$0xf]
    %v2888 = vld [vmem:[%s7 + $0xe0] sm:$0xf]
    %v2889 = vld [vmem:[%s7 + $0xe4] sm:$0xf]
    %v2890 = vld [vmem:[%s7 + $0xe8] sm:$0xf]
    %v2891 = vld [vmem:[%s7 + $0xec] sm:$0xf]
    %v2892 = vld [vmem:[%s7 + $0xf0] sm:$0xf]
    %v2893 = vld [vmem:[%s7 + $0xf4] sm:$0xf]
    %v2894 = vld [vmem:[%s7 + $0xf8] sm:$0xf]
    %v2895 = vld [vmem:[%s7 + $0xfc] sm:$0xf]
    %v2896 = vld [vmem:[%s8] sm:$0x1]
    %v2898 = vlaneseq
    %v2899 = vshrl.u32 %v2898, 7
    %v2900 = vsub.s32 0, %v2899
    %v2901 = vrot.slane %v2896, %v2900
    %v2967 = vunpack.c.l.b16 %v2832
    %v2968 = vunpack.c.l.b16 %v2833
    %v2969 = vunpack.c.l.b16 %v2834
    %v2970 = vunpack.c.l.b16 %v2835
    %v2971 = vunpack.c.l.b16 %v2836
    %v2972 = vunpack.c.l.b16 %v2837
    %v2973 = vunpack.c.l.b16 %v2838
    %v2974 = vunpack.c.l.b16 %v2839
    %v2975 = vunpack.c.l.b16 %v2840
    %v2976 = vunpack.c.l.b16 %v2841
    %v2977 = vunpack.c.l.b16 %v2842
    %v2978 = vunpack.c.l.b16 %v2843
    %v2979 = vunpack.c.l.b16 %v2844
    %v2980 = vunpack.c.l.b16 %v2845
    %v2981 = vunpack.c.l.b16 %v2846
    %v2982 = vunpack.c.l.b16 %v2847
    %v2983 = vunpack.c.l.b16 %v2848
    %v2984 = vunpack.c.l.b16 %v2849
    %v2985 = vunpack.c.l.b16 %v2850
    %v2986 = vunpack.c.l.b16 %v2851
    %v2987 = vunpack.c.l.b16 %v2852
    %v2988 = vunpack.c.l.b16 %v2853
    %v2989 = vunpack.c.l.b16 %v2854
    %v2990 = vunpack.c.l.b16 %v2855
    %v2991 = vunpack.c.l.b16 %v2856
    %v2992 = vunpack.c.l.b16 %v2857
    %v2993 = vunpack.c.l.b16 %v2858
    %v2994 = vunpack.c.l.b16 %v2859
    %v2995 = vunpack.c.l.b16 %v2860
    %v2996 = vunpack.c.l.b16 %v2861
    %v2997 = vunpack.c.l.b16 %v2862
    %v2998 = vunpack.c.l.b16 %v2863
    %v2999 = vunpack.c.l.b16 %v2864
    %v3000 = vunpack.c.l.b16 %v2865
    %v3001 = vunpack.c.l.b16 %v2866
    %v3002 = vunpack.c.l.b16 %v2867
    %v3003 = vunpack.c.l.b16 %v2868
    %v3004 = vunpack.c.l.b16 %v2869
    %v3005 = vunpack.c.l.b16 %v2870
    %v3006 = vunpack.c.l.b16 %v2871
    %v3007 = vunpack.c.l.b16 %v2872
    %v3008 = vunpack.c.l.b16 %v2873
    %v3009 = vunpack.c.l.b16 %v2874
    %v3010 = vunpack.c.l.b16 %v2875
    %v3011 = vunpack.c.l.b16 %v2876
    %v3012 = vunpack.c.l.b16 %v2877
    %v3013 = vunpack.c.l.b16 %v2878
    %v3014 = vunpack.c.l.b16 %v2879
    %v3015 = vunpack.c.l.b16 %v2880
    %v3016 = vunpack.c.l.b16 %v2881
    %v3017 = vunpack.c.l.b16 %v2882
    %v3018 = vunpack.c.l.b16 %v2883
    %v3019 = vunpack.c.l.b16 %v2884
    %v3020 = vunpack.c.l.b16 %v2885
    %v3021 = vunpack.c.l.b16 %v2886
    %v3022 = vunpack.c.l.b16 %v2887
    %v3023 = vunpack.c.l.b16 %v2888
    %v3024 = vunpack.c.l.b16 %v2889
    %v3025 = vunpack.c.l.b16 %v2890
    %v3026 = vunpack.c.l.b16 %v2891
    %v3027 = vunpack.c.l.b16 %v2892
    %v3028 = vunpack.c.l.b16 %v2893
    %v3029 = vunpack.c.l.b16 %v2894
    %v3030 = vunpack.c.l.b16 %v2895
    %v3031 = vpack.c.b16 %v2968, %v2967
    %v3032 = vpack.c.b16 %v2970, %v2969
    %v3033 = vpack.c.b16 %v2972, %v2971
    %v3034 = vpack.c.b16 %v2974, %v2973
    %v3035 = vpack.c.b16 %v2976, %v2975
    %v3036 = vpack.c.b16 %v2978, %v2977
    %v3037 = vpack.c.b16 %v2980, %v2979
    %v3038 = vpack.c.b16 %v2982, %v2981
    %v3039 = vpack.c.b16 %v2984, %v2983
    %v3040 = vpack.c.b16 %v2986, %v2985
    %v3041 = vpack.c.b16 %v2988, %v2987
    %v3042 = vpack.c.b16 %v2990, %v2989
    %v3043 = vpack.c.b16 %v2992, %v2991
    %v3044 = vpack.c.b16 %v2994, %v2993
    %v3045 = vpack.c.b16 %v2996, %v2995
    %v3046 = vpack.c.b16 %v2998, %v2997
    %v3047 = vpack.c.b16 %v3000, %v2999
    %v3048 = vpack.c.b16 %v3002, %v3001
    %v3049 = vpack.c.b16 %v3004, %v3003
    %v3050 = vpack.c.b16 %v3006, %v3005
    %v3051 = vpack.c.b16 %v3008, %v3007
    %v3052 = vpack.c.b16 %v3010, %v3009
    %v3053 = vpack.c.b16 %v3012, %v3011
    %v3054 = vpack.c.b16 %v3014, %v3013
    %v3055 = vpack.c.b16 %v3016, %v3015
    %v3056 = vpack.c.b16 %v3018, %v3017
    %v3057 = vpack.c.b16 %v3020, %v3019
    %v3058 = vpack.c.b16 %v3022, %v3021
    %v3059 = vpack.c.b16 %v3024, %v3023
    %v3060 = vpack.c.b16 %v3026, %v3025
    %v3061 = vpack.c.b16 %v3028, %v3027
    %v3062 = vpack.c.b16 %v3030, %v3029
    %3095 = vmatprep.subr.bf16.mxu0 0
    %3096 = vmatpush1.bf16.msra.mxu0 %v3038
    %3097 = vmatprep.subr.bf16.mxu0 0
    %3098 = vmatpush1.bf16.msra.mxu0 %v3037
    %3099 = vmatprep.subr.bf16.mxu0 0
    %3100 = vmatpush1.bf16.msra.mxu0 %v3036
    %3101 = vmatprep.subr.bf16.mxu0 0
    %3102 = vmatpush1.bf16.msra.mxu0 %v3035
    %3103 = vmatprep.subr.bf16.mxu0 0
    %3104 = vmatpush1.bf16.msra.mxu0 %v3034
    %3105 = vmatprep.subr.bf16.mxu0 0
    %3106 = vmatpush1.bf16.msra.mxu0 %v3033
    %3107 = vmatprep.subr.bf16.mxu0 0
    %3108 = vmatpush1.bf16.msra.mxu0 %v3032
    %3109 = vmatprep.subr.bf16.mxu0 0
    %3110 = vmatpush1.bf16.msra.mxu0 %v3031
    %3111 = vmatprep.subr.bf16.mxu0 0
    %3112 = vmatpush2.bf16.msra.mxu0 %v3046
    %3113 = vmatprep.subr.bf16.mxu0 0
    %3114 = vmatpush2.bf16.msra.mxu0 %v3045
    %3115 = vmatprep.subr.bf16.mxu0 0
    %3116 = vmatpush2.bf16.msra.mxu0 %v3044
    %3117 = vmatprep.subr.bf16.mxu0 0
    %3118 = vmatpush2.bf16.msra.mxu0 %v3043
    %3119 = vmatprep.subr.bf16.mxu0 0
    %3120 = vmatpush2.bf16.msra.mxu0 %v3042
    %3121 = vmatprep.subr.bf16.mxu0 0
    %3122 = vmatpush2.bf16.msra.mxu0 %v3041
    %3123 = vmatprep.subr.bf16.mxu0 0
    %3124 = vmatpush2.bf16.msra.mxu0 %v3040
    %3125 = vmatprep.subr.bf16.mxu0 0
    %3126 = vmatpush2.bf16.msra.mxu0 %v3039
    %3127 = vmatprep.mubr.bf16.mxu0 %v2829
    %3128 = vmatmul.mubr.bf16.gmra.mxu0 %v2828
    %v3129 = vpop.f32.mrf.mxu0
    %v3130 = vadd.f32 %v2901, %v3129
    %v3131 = vpop.f32.mrf.mxu0
    %v3132 = vpop.f32.mrf.mxu0
    %v3133 = vpop.f32.mrf.mxu0
    %3134 = vdwg.mxu0
    %3135 = vmatprep.subr.bf16.mxu0 0
    %3136 = vmatpush1.bf16.msra.mxu0 %v3054
    %3137 = vmatprep.subr.bf16.mxu0 0
    %3138 = vmatpush1.bf16.msra.mxu0 %v3053
    %3139 = vmatprep.subr.bf16.mxu0 0
    %3140 = vmatpush1.bf16.msra.mxu0 %v3052
    %3141 = vmatprep.subr.bf16.mxu0 0
    %3142 = vmatpush1.bf16.msra.mxu0 %v3051
    %3143 = vmatprep.subr.bf16.mxu0 0
    %3144 = vmatpush1.bf16.msra.mxu0 %v3050
    %3145 = vmatprep.subr.bf16.mxu0 0
    %3146 = vmatpush1.bf16.msra.mxu0 %v3049
    %3147 = vmatprep.subr.bf16.mxu0 0
    %3148 = vmatpush1.bf16.msra.mxu0 %v3048
    %3149 = vmatprep.subr.bf16.mxu0 0
    %3150 = vmatpush1.bf16.msra.mxu0 %v3047
    %3151 = vmatprep.subr.bf16.mxu0 0
    %3152 = vmatpush2.bf16.msra.mxu0 %v3062
    %3153 = vmatprep.subr.bf16.mxu0 0
    %3154 = vmatpush2.bf16.msra.mxu0 %v3061
    %3155 = vmatprep.subr.bf16.mxu0 0
    %3156 = vmatpush2.bf16.msra.mxu0 %v3060
    %3157 = vmatprep.subr.bf16.mxu0 0
    %3158 = vmatpush2.bf16.msra.mxu0 %v3059
    %3159 = vmatprep.subr.bf16.mxu0 0
    %3160 = vmatpush2.bf16.msra.mxu0 %v3058
    %3161 = vmatprep.subr.bf16.mxu0 0
    %3162 = vmatpush2.bf16.msra.mxu0 %v3057
    %3163 = vmatprep.subr.bf16.mxu0 0
    %3164 = vmatpush2.bf16.msra.mxu0 %v3056
    %3165 = vmatprep.subr.bf16.mxu0 0
    %3166 = vmatpush2.bf16.msra.mxu0 %v3055
    %3167 = vmatprep.mubr.bf16.mxu0 %v2831
    %3168 = vmatmul.mubr.bf16.gmra.mxu0 %v2830
    %v3169 = vpop.f32.mrf.mxu0
    %v3170 = vadd.f32 %v3130, %v3169
    %v3171 = vpop.f32.mrf.mxu0
    %v3172 = vpop.f32.mrf.mxu0
    %v3173 = vpop.f32.mrf.mxu0
    %3174 = vdwg.mxu0
    %3175 = vst [vmem:[#allocation2] sm:$0x3] %v3170
    // Predicated region
    $region38: #{mlp_classification_forward.1} parent=1 // pred_check
      _
    $region39: #{mlp_classification_forward.1} parent=1 // pred_check_branch
      %3177 = sbr.rel (0) target = $region41
    $region40: #{mlp_classification_forward.1} parent=1 // pred_region
      %s3179 = ssub.s32 32, 32
      %3180 = vsyncadd [#allocation3], %s3179
      %s3182 = sshll.u32 [#allocation2], 4
      %s3183 = int_to_ptr.vmem [resolvable:$true] %s3182
      %3185 = dma.vmem_to_hbm [thread:$0]  %s3183, 32, %s9, [#allocation3]
    $region41: #{mlp_classification_forward.1} parent=1 // pred_fallthru
      _
    // Predicated region
    $region42: #{mlp_classification_forward.1} parent=1 // pred_check
      _
    $region43: #{mlp_classification_forward.1} parent=1 // pred_check_branch
      %3187 = sbr.rel (0) target = $region45
    $region44: #{mlp_classification_forward.1} parent=1 // pred_region
      %3188 = dma.done [#allocation3], 32
    $region45: #{mlp_classification_forward.1} parent=1 // pred_fallthru
      _
    %3189 = vsyncpa [#allocation3], 1

</llo_original>
